<compile_context>
chip_gen: v7x
topology: tpu7x:2x2x1
jax: 0.10.0
libtpu: 0.0.40
codegen_flags: <defaults>
</compile_context>

<pallas_src>
import functools
import math

import jax
import jax.numpy as jnp
import numpy as np
from jax import lax
from jax.experimental import pallas as pl
from jax.experimental.pallas import tpu as pltpu


# ----------------------------- Pallas kernel --------------------------------


def _layernorm(x, w, b, eps=1e-5):
    mu = jnp.mean(x, axis=-1, keepdims=True)
    var = jnp.mean((x - mu) ** 2, axis=-1, keepdims=True)
    return (x - mu) * lax.rsqrt(var + eps) * w + b


def _gelu_exact(x):
    # PyTorch nn.GELU() default: exact erf-based GELU (kept for semantic fidelity).
    # TODO(synk): tanh-approx GELU would move this off the VPU polynomial chain onto
    # the EUP at realistic widths, if exact-GELU fidelity is negotiable.
    return 0.5 * x * (1.0 + lax.erf(x * (1.0 / math.sqrt(2.0))))


def block_kernel(
    x_ref,
    ln1w_ref, ln1b_ref,
    wq_ref, bq_ref, wk_ref, bk_ref, wv_ref, bv_ref,
    wo_ref, bo_ref,
    ln2w_ref, ln2b_ref,
    wfc_ref, bfc_ref,
    wpr_ref, bpr_ref,
    o_ref,
    *,
    seq: int,
    n_head: int,
    head_dim: int,
):
    bf16 = jnp.bfloat16
    f32 = jnp.float32
    C = n_head * head_dim
    scale = 1.0 / math.sqrt(head_dim)

    x = x_ref[...].astype(f32)                                 # (T, C) f32

    # ---------------- attention branch ----------------
    h1 = _layernorm(x, ln1w_ref[...], ln1b_ref[...])           # f32
    # One hoisted broadcast of the normalized activations across heads; every
    # attention matmul below is a plain leading-batch batched matmul (no relayouts).
    h1h = jnp.broadcast_to(h1.astype(bf16), (n_head, seq, C))  # (H, T, C) bf16

    q = jnp.einsum('htc,hcd->htd', h1h, wq_ref[...],
                   preferred_element_type=f32) + bq_ref[...]   # (H, T, hd) f32
    k = jnp.einsum('htc,hcd->htd', h1h, wk_ref[...],
                   preferred_element_type=f32) + bk_ref[...]
    v = jnp.einsum('htc,hcd->htd', h1h, wv_ref[...],
                   preferred_element_type=f32) + bv_ref[...]
    q = q * scale                                              # fold 1/sqrt(hd) once into q

    row = lax.broadcasted_iota(jnp.int32, (seq, seq), 0)
    col = lax.broadcasted_iota(jnp.int32, (seq, seq), 1)
    causal = (row >= col)[None, :, :]                          # (1, T, T)

    s = jnp.einsum('hqd,hkd->hqk', q.astype(bf16), k.astype(bf16),
                   preferred_element_type=f32)                 # (H, T, T) f32
    s = jnp.where(causal, s, -1e30)
    m = jnp.max(s, axis=-1, keepdims=True)
    e = jnp.exp(s - m)
    l = jnp.sum(e, axis=-1, keepdims=True)
    p = e * pl.reciprocal(l, approx=True)                      # EUP reciprocal, not a divide

    y = jnp.einsum('hqk,hkd->hqd', p.astype(bf16), v.astype(bf16),
                   preferred_element_type=f32)                 # (H, T, hd) f32

    # Output projection: contract heads directly against the head-major wo
    # (no (H,T,hd)->(T,C) relayout, no scratch slab).
    yo = jnp.einsum('hqd,hdc->hqc', y.astype(bf16), wo_ref[...],
                    preferred_element_type=f32)                # (H, T, C) f32
    attn = jnp.sum(yo, axis=0) + bo_ref[...]                   # (T, C) f32
    x1 = x + attn                                              # residual 1 (f32)

    # ---------------- MLP branch ----------------
    h2 = _layernorm(x1, ln2w_ref[...], ln2b_ref[...])
    f = jnp.dot(h2.astype(bf16), wfc_ref[...],
                preferred_element_type=f32) + bfc_ref[...]     # (T, 4C) f32
    f = _gelu_exact(f)
    g = jnp.dot(f.astype(bf16), wpr_ref[...],
                preferred_element_type=f32) + bpr_ref[...]     # (T, C) f32
    out = x1 + g                                               # residual 2 (f32)

    # NOTE: at C=32 this store is lane-sparse (<128 lanes); at realistic widths
    # (C >= 128) the identical spec becomes lane-dense automatically.
    o_ref[...] = out.astype(o_ref.dtype)


# ----------------------------- wrapper ---------------------------------------


def prepare_block_params(params, *, n_head):
    """One-time preparation: split the fused c_attn weight, reshape to head-major
    layouts, and cast matmul weights to bf16.  Done once so no per-call cast /
    relayout cost lands in the hot path."""
    (ln1w, ln1b, wqkv, bqkv, wo, bo, ln2w, ln2b, wfc, bfc, wpr, bpr) = params
    C = wo.shape[0]
    hd = C // n_head
    bf16 = jnp.bfloat16

    def w_heads(w):   # (C, C) -> (H, C, hd)
        return jnp.transpose(w.reshape(C, n_head, hd), (1, 0, 2)).astype(bf16)

    def b_heads(b):   # (1, C) -> (H, 1, hd)
        return b.reshape(n_head, hd)[:, None, :].astype(jnp.float32)

    wq, wk, wv = wqkv[:, 0:C], wqkv[:, C:2 * C], wqkv[:, 2 * C:3 * C]
    bq, bk, bv = bqkv[:, 0:C], bqkv[:, C:2 * C], bqkv[:, 2 * C:3 * C]

    return (
        ln1w, ln1b,
        w_heads(wq), b_heads(bq),
        w_heads(wk), b_heads(bk),
        w_heads(wv), b_heads(bv),
        wo.reshape(n_head, hd, C).astype(bf16), bo,
        ln2w, ln2b,
        wfc.astype(bf16), bfc,
        wpr.astype(bf16), bpr,
    )


def transformer_block(x, prepared, *, n_head):
    B, T, C = x.shape
    hd = C // n_head

    kern = functools.partial(block_kernel, seq=T, n_head=n_head, head_dim=hd)

    def resident(a):
        nd = a.ndim
        return pl.BlockSpec(a.shape, lambda b, nd=nd: (0,) * nd)   # weight stays in VMEM

    return pl.pallas_call(
        kern,
        out_shape=jax.ShapeDtypeStruct((B, T, C), x.dtype),
        grid=(B,),                                                 # batch is a parallel grid axis
        in_specs=[pl.BlockSpec((None, T, C), lambda b: (b, 0, 0))]
                 + [resident(a) for a in prepared],
        out_specs=pl.BlockSpec((None, T, C), lambda b: (b, 0, 0)),
        compiler_params=pltpu.CompilerParams(
            dimension_semantics=("parallel",),                     # 2nd TC on v7x
            vmem_limit_bytes=48 * 1024 * 1024,                     # fits v7x's 64-MiB VMEM
        ),
    )(x, *prepared)


# ----------------------------- reference (pure JAX, f32) ----------------------


def block_reference(x, params, *, n_head):
    (ln1w, ln1b, wqkv, bqkv, wo, bo, ln2w, ln2b, wfc, bfc, wpr, bpr) = params
    B, T, C = x.shape
    hd = C // n_head

    def ln(v, w, b):
        mu = jnp.mean(v, axis=-1, keepdims=True)
        var = jnp.mean((v - mu) ** 2, axis=-1, keepdims=True)
        return (v - mu) / jnp.sqrt(var + 1e-5) * w[0] + b[0]

    h = ln(x, ln1w, ln1b)
    qkv = h @ wqkv + bqkv[0]
    q, k, v = jnp.split(qkv, 3, axis=-1)
    q = q.reshape(B, T, n_head, hd).transpose(0, 2, 1, 3)
    k = k.reshape(B, T, n_head, hd).transpose(0, 2, 1, 3)
    v = v.reshape(B, T, n_head, hd).transpose(0, 2, 1, 3)
    att = (q @ jnp.swapaxes(k, -2, -1)) / math.sqrt(hd)
    mask = jnp.tril(jnp.ones((T, T), bool))
    att = jnp.where(mask, att, -jnp.inf)
    att = jax.nn.softmax(att, axis=-1)
    y = (att @ v).transpose(0, 2, 1, 3).reshape(B, T, C)
    y = y @ wo + bo[0]
    x1 = x + y

    h2 = ln(x1, ln2w, ln2b)
    f = h2 @ wfc + bfc[0]
    f = 0.5 * f * (1.0 + lax.erf(f / math.sqrt(2.0)))
    f = f @ wpr + bpr[0]
    return x1 + f


# ----------------------------- main -------------------------------------------


if __name__ == "__main__":
    # config: n_embd=32, n_head=4, bias=True, dropout=0.0 (eval), block_size >= T
    B, T, C, n_head = 2, 8, 32, 4

    key = jax.random.PRNGKey(0)
    keys = jax.random.split(key, 16)
    std = 0.02

    def rnd(k, shape):
        return (std * jax.random.normal(k, shape)).astype(jnp.float32)

    # LayerNorm params stored as (1, C) rows.
    ln1w = jnp.ones((1, C), jnp.float32)
    ln1b = jnp.zeros((1, C), jnp.float32)
    ln2w = jnp.ones((1, C), jnp.float32)
    ln2b = jnp.zeros((1, C), jnp.float32)

    # Linear weights pre-transposed to (in, out); biases as (1, out).
    wqkv = rnd(keys[0], (C, 3 * C))
    bqkv = rnd(keys[1], (1, 3 * C))
    wo = rnd(keys[2], (C, C))
    bo = rnd(keys[3], (1, C))
    wfc = rnd(keys[4], (C, 4 * C))
    bfc = rnd(keys[5], (1, 4 * C))
    wpr = rnd(keys[6], (4 * C, C))
    bpr = rnd(keys[7], (1, C))

    params = (ln1w, ln1b, wqkv, bqkv, wo, bo, ln2w, ln2b, wfc, bfc, wpr, bpr)
    prepared = prepare_block_params(params, n_head=n_head)       # one-time bf16/head-major prep

    x = jax.random.normal(keys[8], (B, T, C), jnp.float32)

    out = jax.block_until_ready(transformer_block(x, prepared, n_head=n_head))
    ref = jax.block_until_ready(block_reference(x, params, n_head=n_head))

    # Tolerance loosened vs. pure-f32 because the kernel uses bf16 MXU operands
    # (with f32 accumulation) and an approximate EUP reciprocal in the softmax.
    np.testing.assert_allclose(np.asarray(out), np.asarray(ref), atol=2e-2, rtol=2e-2)

    print("KERNEL_OK")
</pallas_src>

<mosaic_0001>
module attributes {stable_mosaic.version = 11 : i64} {
  func.func @block_kernel(%arg0: i32, %arg1: memref<1x8x32xf32, #tpu.memory_space<vmem>>, %arg2: memref<1x32xf32, #tpu.memory_space<vmem>>, %arg3: memref<1x32xf32, #tpu.memory_space<vmem>>, %arg4: memref<4x32x8xbf16, #tpu.memory_space<vmem>>, %arg5: memref<4x1x8xf32, #tpu.memory_space<vmem>>, %arg6: memref<4x32x8xbf16, #tpu.memory_space<vmem>>, %arg7: memref<4x1x8xf32, #tpu.memory_space<vmem>>, %arg8: memref<4x32x8xbf16, #tpu.memory_space<vmem>>, %arg9: memref<4x1x8xf32, #tpu.memory_space<vmem>>, %arg10: memref<4x8x32xbf16, #tpu.memory_space<vmem>>, %arg11: memref<1x32xf32, #tpu.memory_space<vmem>>, %arg12: memref<1x32xf32, #tpu.memory_space<vmem>>, %arg13: memref<1x32xf32, #tpu.memory_space<vmem>>, %arg14: memref<32x128xbf16, #tpu.memory_space<vmem>>, %arg15: memref<1x128xf32, #tpu.memory_space<vmem>>, %arg16: memref<128x32xbf16, #tpu.memory_space<vmem>>, %arg17: memref<1x32xf32, #tpu.memory_space<vmem>>, %arg18: memref<1x8x32xf32, #tpu.memory_space<vmem>>) attributes {dimension_semantics = [#tpu.dimension_semantics<parallel>], iteration_bounds = array<i64: 2>, scalar_prefetch = 0 : i64, scratch_operands = 0 : i64, tpu.core_type = #tpu.core_type<tc>, window_params = [{transform_indices = @transform_0, window_bounds = array<i64: 1, 8, 32>}, {pipeline_mode = #tpu.pipeline_mode<synchronous>, transform_indices = @transform_1, window_bounds = array<i64: 1, 32>}, {pipeline_mode = #tpu.pipeline_mode<synchronous>, transform_indices = @transform_2, window_bounds = array<i64: 1, 32>}, {pipeline_mode = #tpu.pipeline_mode<synchronous>, transform_indices = @transform_3, window_bounds = array<i64: 4, 32, 8>}, {pipeline_mode = #tpu.pipeline_mode<synchronous>, transform_indices = @transform_4, window_bounds = array<i64: 4, 1, 8>}, {pipeline_mode = #tpu.pipeline_mode<synchronous>, transform_indices = @transform_5, window_bounds = array<i64: 4, 32, 8>}, {pipeline_mode = #tpu.pipeline_mode<synchronous>, transform_indices = @transform_6, window_bounds = array<i64: 4, 1, 8>}, {pipeline_mode = #tpu.pipeline_mode<synchronous>, transform_indices = @transform_7, window_bounds = array<i64: 4, 32, 8>}, {pipeline_mode = #tpu.pipeline_mode<synchronous>, transform_indices = @transform_8, window_bounds = array<i64: 4, 1, 8>}, {pipeline_mode = #tpu.pipeline_mode<synchronous>, transform_indices = @transform_9, window_bounds = array<i64: 4, 8, 32>}, {pipeline_mode = #tpu.pipeline_mode<synchronous>, transform_indices = @transform_10, window_bounds = array<i64: 1, 32>}, {pipeline_mode = #tpu.pipeline_mode<synchronous>, transform_indices = @transform_11, window_bounds = array<i64: 1, 32>}, {pipeline_mode = #tpu.pipeline_mode<synchronous>, transform_indices = @transform_12, window_bounds = array<i64: 1, 32>}, {pipeline_mode = #tpu.pipeline_mode<synchronous>, transform_indices = @transform_13, window_bounds = array<i64: 32, 128>}, {pipeline_mode = #tpu.pipeline_mode<synchronous>, transform_indices = @transform_14, window_bounds = array<i64: 1, 128>}, {pipeline_mode = #tpu.pipeline_mode<synchronous>, transform_indices = @transform_15, window_bounds = array<i64: 128, 32>}, {pipeline_mode = #tpu.pipeline_mode<synchronous>, transform_indices = @transform_16, window_bounds = array<i64: 1, 32>}, {transform_indices = @transform_17, window_bounds = array<i64: 1, 8, 32>}]} {
    %c0 = arith.constant 0 : index
    %c0_0 = arith.constant 0 : index
    %c0_1 = arith.constant 0 : index
    %0 = vector.load %arg1[%c0, %c0_0, %c0_1] : memref<1x8x32xf32, #tpu.memory_space<vmem>>, vector<1x8x32xf32>
    %1 = vector.shape_cast %0 : vector<1x8x32xf32> to vector<8x32xf32>
    %c0_2 = arith.constant 0 : index
    %c0_3 = arith.constant 0 : index
    %2 = vector.load %arg2[%c0_2, %c0_3] : memref<1x32xf32, #tpu.memory_space<vmem>>, vector<1x32xf32>
    %c0_4 = arith.constant 0 : index
    %c0_5 = arith.constant 0 : index
    %3 = vector.load %arg3[%c0_4, %c0_5] : memref<1x32xf32, #tpu.memory_space<vmem>>, vector<1x32xf32>
    %cst = arith.constant dense<0.000000e+00> : vector<8xf32>
    %4 = vector.multi_reduction <add>, %1, %cst [1] : vector<8x32xf32> to vector<8xf32>
    %5 = vector.shape_cast %4 : vector<8xf32> to vector<8x1xf32>
    %cst_6 = arith.constant 3.200000e+01 : f32
    %6 = vector.broadcast %cst_6 : f32 to vector<8x1xf32>
    %7 = arith.divf %5, %6 : vector<8x1xf32>
    %8 = vector.broadcast %7 : vector<8x1xf32> to vector<8x32xf32>
    %9 = arith.subf %1, %8 : vector<8x32xf32>
    %10 = arith.mulf %9, %9 : vector<8x32xf32>
    %cst_7 = arith.constant dense<0.000000e+00> : vector<8xf32>
    %11 = vector.multi_reduction <add>, %10, %cst_7 [1] : vector<8x32xf32> to vector<8xf32>
    %12 = vector.shape_cast %11 : vector<8xf32> to vector<8x1xf32>
    %cst_8 = arith.constant 3.200000e+01 : f32
    %13 = vector.broadcast %cst_8 : f32 to vector<8x1xf32>
    %14 = arith.divf %12, %13 : vector<8x1xf32>
    %15 = vector.broadcast %7 : vector<8x1xf32> to vector<8x32xf32>
    %16 = arith.subf %1, %15 : vector<8x32xf32>
    %cst_9 = arith.constant 9.99999974E-6 : f32
    %17 = vector.broadcast %cst_9 : f32 to vector<8x1xf32>
    %18 = arith.addf %14, %17 : vector<8x1xf32>
    %19 = math.rsqrt %18 : vector<8x1xf32>
    %20 = vector.broadcast %19 : vector<8x1xf32> to vector<8x32xf32>
    %21 = arith.mulf %16, %20 : vector<8x32xf32>
    %22 = vector.broadcast %2 : vector<1x32xf32> to vector<8x32xf32>
    %23 = arith.mulf %21, %22 : vector<8x32xf32>
    %24 = vector.broadcast %3 : vector<1x32xf32> to vector<8x32xf32>
    %25 = arith.addf %23, %24 : vector<8x32xf32>
    %26 = arith.truncf %25 : vector<8x32xf32> to vector<8x32xbf16>
    %27 = vector.shape_cast %26 : vector<8x32xbf16> to vector<1x8x32xbf16>
    %28 = vector.broadcast %27 : vector<1x8x32xbf16> to vector<4x8x32xbf16>
    %c0_10 = arith.constant 0 : index
    %c0_11 = arith.constant 0 : index
    %c0_12 = arith.constant 0 : index
    %29 = vector.load %arg4[%c0_10, %c0_11, %c0_12] : memref<4x32x8xbf16, #tpu.memory_space<vmem>>, vector<4x32x8xbf16>
    "tpu.trace_start"() <{level = 10 : i32, message = "htc,hcd->htd"}> : () -> ()
    %cst_13 = arith.constant dense<0.000000e+00> : vector<4x8x8xf32>
    %30 = tpu.matmul %28, %29, %cst_13 {dimension_numbers = #tpu.dot_dimension_numbers<[2], [1], [1], [2], [0, 0, 0, 1, 1, 2], [0], [0]>} : vector<4x8x32xbf16>, vector<4x32x8xbf16>, vector<4x8x8xf32> -> vector<4x8x8xf32>
    "tpu.trace_stop"() : () -> ()
    %c0_14 = arith.constant 0 : index
    %c0_15 = arith.constant 0 : index
    %c0_16 = arith.constant 0 : index
    %31 = vector.load %arg5[%c0_14, %c0_15, %c0_16] : memref<4x1x8xf32, #tpu.memory_space<vmem>>, vector<4x1x8xf32>
    %32 = vector.broadcast %31 : vector<4x1x8xf32> to vector<4x8x8xf32>
    %33 = arith.addf %30, %32 : vector<4x8x8xf32>
    %c0_17 = arith.constant 0 : index
    %c0_18 = arith.constant 0 : index
    %c0_19 = arith.constant 0 : index
    %34 = vector.load %arg6[%c0_17, %c0_18, %c0_19] : memref<4x32x8xbf16, #tpu.memory_space<vmem>>, vector<4x32x8xbf16>
    "tpu.trace_start"() <{level = 10 : i32, message = "htc,hcd->htd"}> : () -> ()
    %cst_20 = arith.constant dense<0.000000e+00> : vector<4x8x8xf32>
    %35 = tpu.matmul %28, %34, %cst_20 {dimension_numbers = #tpu.dot_dimension_numbers<[2], [1], [1], [2], [0, 0, 0, 1, 1, 2], [0], [0]>} : vector<4x8x32xbf16>, vector<4x32x8xbf16>, vector<4x8x8xf32> -> vector<4x8x8xf32>
    "tpu.trace_stop"() : () -> ()
    %c0_21 = arith.constant 0 : index
    %c0_22 = arith.constant 0 : index
    %c0_23 = arith.constant 0 : index
    %36 = vector.load %arg7[%c0_21, %c0_22, %c0_23] : memref<4x1x8xf32, #tpu.memory_space<vmem>>, vector<4x1x8xf32>
    %37 = vector.broadcast %36 : vector<4x1x8xf32> to vector<4x8x8xf32>
    %38 = arith.addf %35, %37 : vector<4x8x8xf32>
    %c0_24 = arith.constant 0 : index
    %c0_25 = arith.constant 0 : index
    %c0_26 = arith.constant 0 : index
    %39 = vector.load %arg8[%c0_24, %c0_25, %c0_26] : memref<4x32x8xbf16, #tpu.memory_space<vmem>>, vector<4x32x8xbf16>
    "tpu.trace_start"() <{level = 10 : i32, message = "htc,hcd->htd"}> : () -> ()
    %cst_27 = arith.constant dense<0.000000e+00> : vector<4x8x8xf32>
    %40 = tpu.matmul %28, %39, %cst_27 {dimension_numbers = #tpu.dot_dimension_numbers<[2], [1], [1], [2], [0, 0, 0, 1, 1, 2], [0], [0]>} : vector<4x8x32xbf16>, vector<4x32x8xbf16>, vector<4x8x8xf32> -> vector<4x8x8xf32>
    "tpu.trace_stop"() : () -> ()
    %c0_28 = arith.constant 0 : index
    %c0_29 = arith.constant 0 : index
    %c0_30 = arith.constant 0 : index
    %41 = vector.load %arg9[%c0_28, %c0_29, %c0_30] : memref<4x1x8xf32, #tpu.memory_space<vmem>>, vector<4x1x8xf32>
    %42 = vector.broadcast %41 : vector<4x1x8xf32> to vector<4x8x8xf32>
    %43 = arith.addf %40, %42 : vector<4x8x8xf32>
    %cst_31 = arith.constant 0.353553385 : f32
    %44 = vector.broadcast %cst_31 : f32 to vector<4x8x8xf32>
    %45 = arith.mulf %33, %44 : vector<4x8x8xf32>
    %46 = tpu.iota {dimensions = array<i32: 0>} : vector<8x8xi32>
    %47 = tpu.iota {dimensions = array<i32: 1>} : vector<8x8xi32>
    %48 = arith.cmpi sge, %46, %47 : vector<8x8xi32>
    %49 = vector.shape_cast %48 : vector<8x8xi1> to vector<1x8x8xi1>
    %50 = arith.truncf %45 : vector<4x8x8xf32> to vector<4x8x8xbf16>
    %51 = arith.truncf %38 : vector<4x8x8xf32> to vector<4x8x8xbf16>
    "tpu.trace_start"() <{level = 10 : i32, message = "hqd,hkd->hqk"}> : () -> ()
    %cst_32 = arith.constant dense<0.000000e+00> : vector<4x8x8xf32>
    %52 = tpu.matmul %50, %51, %cst_32 {dimension_numbers = #tpu.dot_dimension_numbers<[2], [2], [1], [1], [0, 0, 0, 1, 1, 1], [0], [0]>} : vector<4x8x8xbf16>, vector<4x8x8xbf16>, vector<4x8x8xf32> -> vector<4x8x8xf32>
    %cst_33 = arith.constant -1.000000e+30 : f32
    "tpu.trace_stop"() : () -> ()
    %53 = vector.shape_cast %49 : vector<1x8x8xi1> to vector<1x8x8xi1>
    %54 = vector.broadcast %53 : vector<1x8x8xi1> to vector<4x8x8xi1>
    %55 = vector.broadcast %cst_33 : f32 to vector<4x8x8xf32>
    %56 = arith.select %54, %52, %55 : vector<4x8x8xi1>, vector<4x8x8xf32>
    %cst_34 = arith.constant dense<0xFF800000> : vector<4x8xf32>
    %57 = vector.multi_reduction <maximumf>, %56, %cst_34 [2] : vector<4x8x8xf32> to vector<4x8xf32>
    %58 = vector.shape_cast %57 : vector<4x8xf32> to vector<4x8x1xf32>
    %59 = vector.broadcast %58 : vector<4x8x1xf32> to vector<4x8x8xf32>
    %60 = arith.subf %56, %59 : vector<4x8x8xf32>
    %61 = math.exp %60 : vector<4x8x8xf32>
    %cst_35 = arith.constant dense<0.000000e+00> : vector<4x8xf32>
    %62 = vector.multi_reduction <add>, %61, %cst_35 [2] : vector<4x8x8xf32> to vector<4x8xf32>
    %63 = vector.shape_cast %62 : vector<4x8xf32> to vector<4x8x1xf32>
    %64 = tpu.reciprocal %63 {approx = true} : vector<4x8x1xf32> -> vector<4x8x1xf32>
    %65 = vector.broadcast %64 : vector<4x8x1xf32> to vector<4x8x8xf32>
    %66 = arith.mulf %61, %65 : vector<4x8x8xf32>
    %67 = arith.truncf %66 : vector<4x8x8xf32> to vector<4x8x8xbf16>
    %68 = arith.truncf %43 : vector<4x8x8xf32> to vector<4x8x8xbf16>
    "tpu.trace_start"() <{level = 10 : i32, message = "hqk,hkd->hqd"}> : () -> ()
    %cst_36 = arith.constant dense<0.000000e+00> : vector<4x8x8xf32>
    %69 = tpu.matmul %67, %68, %cst_36 {dimension_numbers = #tpu.dot_dimension_numbers<[2], [1], [1], [2], [0, 0, 0, 1, 1, 2], [0], [0]>} : vector<4x8x8xbf16>, vector<4x8x8xbf16>, vector<4x8x8xf32> -> vector<4x8x8xf32>
    "tpu.trace_stop"() : () -> ()
    %70 = arith.truncf %69 : vector<4x8x8xf32> to vector<4x8x8xbf16>
    %c0_37 = arith.constant 0 : index
    %c0_38 = arith.constant 0 : index
    %c0_39 = arith.constant 0 : index
    %71 = vector.load %arg10[%c0_37, %c0_38, %c0_39] : memref<4x8x32xbf16, #tpu.memory_space<vmem>>, vector<4x8x32xbf16>
    "tpu.trace_start"() <{level = 10 : i32, message = "hqd,hdc->hqc"}> : () -> ()
    %cst_40 = arith.constant dense<0.000000e+00> : vector<4x8x32xf32>
    %72 = tpu.matmul %70, %71, %cst_40 {dimension_numbers = #tpu.dot_dimension_numbers<[2], [1], [1], [2], [0, 0, 0, 1, 1, 2], [0], [0]>} : vector<4x8x8xbf16>, vector<4x8x32xbf16>, vector<4x8x32xf32> -> vector<4x8x32xf32>
    "tpu.trace_stop"() : () -> ()
    %cst_41 = arith.constant dense<0.000000e+00> : vector<8x32xf32>
    %73 = vector.multi_reduction <add>, %72, %cst_41 [0] : vector<4x8x32xf32> to vector<8x32xf32>
    %c0_42 = arith.constant 0 : index
    %c0_43 = arith.constant 0 : index
    %74 = vector.load %arg11[%c0_42, %c0_43] : memref<1x32xf32, #tpu.memory_space<vmem>>, vector<1x32xf32>
    %75 = vector.broadcast %74 : vector<1x32xf32> to vector<8x32xf32>
    %76 = arith.addf %73, %75 : vector<8x32xf32>
    %77 = arith.addf %1, %76 : vector<8x32xf32>
    %c0_44 = arith.constant 0 : index
    %c0_45 = arith.constant 0 : index
    %78 = vector.load %arg12[%c0_44, %c0_45] : memref<1x32xf32, #tpu.memory_space<vmem>>, vector<1x32xf32>
    %c0_46 = arith.constant 0 : index
    %c0_47 = arith.constant 0 : index
    %79 = vector.load %arg13[%c0_46, %c0_47] : memref<1x32xf32, #tpu.memory_space<vmem>>, vector<1x32xf32>
    %cst_48 = arith.constant dense<0.000000e+00> : vector<8xf32>
    %80 = vector.multi_reduction <add>, %77, %cst_48 [1] : vector<8x32xf32> to vector<8xf32>
    %81 = vector.shape_cast %80 : vector<8xf32> to vector<8x1xf32>
    %cst_49 = arith.constant 3.200000e+01 : f32
    %82 = vector.broadcast %cst_49 : f32 to vector<8x1xf32>
    %83 = arith.divf %81, %82 : vector<8x1xf32>
    %84 = vector.broadcast %83 : vector<8x1xf32> to vector<8x32xf32>
    %85 = arith.subf %77, %84 : vector<8x32xf32>
    %86 = arith.mulf %85, %85 : vector<8x32xf32>
    %cst_50 = arith.constant dense<0.000000e+00> : vector<8xf32>
    %87 = vector.multi_reduction <add>, %86, %cst_50 [1] : vector<8x32xf32> to vector<8xf32>
    %88 = vector.shape_cast %87 : vector<8xf32> to vector<8x1xf32>
    %cst_51 = arith.constant 3.200000e+01 : f32
    %89 = vector.broadcast %cst_51 : f32 to vector<8x1xf32>
    %90 = arith.divf %88, %89 : vector<8x1xf32>
    %91 = vector.broadcast %83 : vector<8x1xf32> to vector<8x32xf32>
    %92 = arith.subf %77, %91 : vector<8x32xf32>
    %cst_52 = arith.constant 9.99999974E-6 : f32
    %93 = vector.broadcast %cst_52 : f32 to vector<8x1xf32>
    %94 = arith.addf %90, %93 : vector<8x1xf32>
    %95 = math.rsqrt %94 : vector<8x1xf32>
    %96 = vector.broadcast %95 : vector<8x1xf32> to vector<8x32xf32>
    %97 = arith.mulf %92, %96 : vector<8x32xf32>
    %98 = vector.broadcast %78 : vector<1x32xf32> to vector<8x32xf32>
    %99 = arith.mulf %97, %98 : vector<8x32xf32>
    %100 = vector.broadcast %79 : vector<1x32xf32> to vector<8x32xf32>
    %101 = arith.addf %99, %100 : vector<8x32xf32>
    %102 = arith.truncf %101 : vector<8x32xf32> to vector<8x32xbf16>
    %c0_53 = arith.constant 0 : index
    %c0_54 = arith.constant 0 : index
    %103 = vector.load %arg14[%c0_53, %c0_54] : memref<32x128xbf16, #tpu.memory_space<vmem>>, vector<32x128xbf16>
    %cst_55 = arith.constant dense<0.000000e+00> : vector<8x128xf32>
    %104 = tpu.matmul %102, %103, %cst_55 {dimension_numbers = #tpu.dot_dimension_numbers<[1], [0], [0], [1], [0, 0, 1, 1], [], []>} : vector<8x32xbf16>, vector<32x128xbf16>, vector<8x128xf32> -> vector<8x128xf32>
    %c0_56 = arith.constant 0 : index
    %c0_57 = arith.constant 0 : index
    %105 = vector.load %arg15[%c0_56, %c0_57] : memref<1x128xf32, #tpu.memory_space<vmem>>, vector<1x128xf32>
    %106 = vector.broadcast %105 : vector<1x128xf32> to vector<8x128xf32>
    %107 = arith.addf %104, %106 : vector<8x128xf32>
    %cst_58 = arith.constant 5.000000e-01 : f32
    %108 = vector.broadcast %cst_58 : f32 to vector<8x128xf32>
    %109 = arith.mulf %108, %107 : vector<8x128xf32>
    %cst_59 = arith.constant 0.707106769 : f32
    %110 = vector.broadcast %cst_59 : f32 to vector<8x128xf32>
    %111 = arith.mulf %107, %110 : vector<8x128xf32>
    %112 = math.erf %111 : vector<8x128xf32>
    %cst_60 = arith.constant 1.000000e+00 : f32
    %113 = vector.broadcast %cst_60 : f32 to vector<8x128xf32>
    %114 = arith.addf %113, %112 : vector<8x128xf32>
    %115 = arith.mulf %109, %114 : vector<8x128xf32>
    %116 = arith.truncf %115 : vector<8x128xf32> to vector<8x128xbf16>
    %c0_61 = arith.constant 0 : index
    %c0_62 = arith.constant 0 : index
    %117 = vector.load %arg16[%c0_61, %c0_62] : memref<128x32xbf16, #tpu.memory_space<vmem>>, vector<128x32xbf16>
    %cst_63 = arith.constant dense<0.000000e+00> : vector<8x32xf32>
    %118 = tpu.matmul %116, %117, %cst_63 {dimension_numbers = #tpu.dot_dimension_numbers<[1], [0], [0], [1], [0, 0, 1, 1], [], []>} : vector<8x128xbf16>, vector<128x32xbf16>, vector<8x32xf32> -> vector<8x32xf32>
    %c0_64 = arith.constant 0 : index
    %c0_65 = arith.constant 0 : index
    %119 = vector.load %arg17[%c0_64, %c0_65] : memref<1x32xf32, #tpu.memory_space<vmem>>, vector<1x32xf32>
    %120 = vector.broadcast %119 : vector<1x32xf32> to vector<8x32xf32>
    %121 = arith.addf %118, %120 : vector<8x32xf32>
    %122 = arith.addf %77, %121 : vector<8x32xf32>
    %c0_66 = arith.constant 0 : index
    %c0_67 = arith.constant 0 : index
    %c0_68 = arith.constant 0 : index
    %123 = vector.load %arg18[%c0_66, %c0_67, %c0_68] : memref<1x8x32xf32, #tpu.memory_space<vmem>>, vector<1x8x32xf32>
    %124 = vector.shape_cast %123 : vector<1x8x32xf32> to vector<8x32xf32>
    %125 = vector.shape_cast %122 : vector<8x32xf32> to vector<1x8x32xf32>
    tpu.vector_store %arg18[%c0_66, %c0_67, %c0_68], %125 {strides = array<i32>} : memref<1x8x32xf32, #tpu.memory_space<vmem>>, vector<1x8x32xf32>,
    return
  }
  func.func @transform_0(%arg0: i32) -> (i32, i32, i32) {
    %c0_i32 = arith.constant 0 : i32
    %c0_i32_0 = arith.constant 0 : i32
    %c0_i32_1 = arith.constant 0 : i32
    return %arg0, %c0_i32, %c0_i32_0 : i32, i32, i32
  }
  func.func @transform_1(%arg0: i32) -> (i32, i32) {
    %c0_i32 = arith.constant 0 : i32
    %c0_i32_0 = arith.constant 0 : i32
    %c0_i32_1 = arith.constant 0 : i32
    return %c0_i32, %c0_i32_0 : i32, i32
  }
  func.func @transform_2(%arg0: i32) -> (i32, i32) {
    %c0_i32 = arith.constant 0 : i32
    %c0_i32_0 = arith.constant 0 : i32
    %c0_i32_1 = arith.constant 0 : i32
    return %c0_i32, %c0_i32_0 : i32, i32
  }
  func.func @transform_3(%arg0: i32) -> (i32, i32, i32) {
    %c0_i32 = arith.constant 0 : i32
    %c0_i32_0 = arith.constant 0 : i32
    %c0_i32_1 = arith.constant 0 : i32
    %c0_i32_2 = arith.constant 0 : i32
    return %c0_i32, %c0_i32_0, %c0_i32_1 : i32, i32, i32
  }
  func.func @transform_4(%arg0: i32) -> (i32, i32, i32) {
    %c0_i32 = arith.constant 0 : i32
    %c0_i32_0 = arith.constant 0 : i32
    %c0_i32_1 = arith.constant 0 : i32
    %c0_i32_2 = arith.constant 0 : i32
    return %c0_i32, %c0_i32_0, %c0_i32_1 : i32, i32, i32
  }
  func.func @transform_5(%arg0: i32) -> (i32, i32, i32) {
    %c0_i32 = arith.constant 0 : i32
    %c0_i32_0 = arith.constant 0 : i32
    %c0_i32_1 = arith.constant 0 : i32
    %c0_i32_2 = arith.constant 0 : i32
    return %c0_i32, %c0_i32_0, %c0_i32_1 : i32, i32, i32
  }
  func.func @transform_6(%arg0: i32) -> (i32, i32, i32) {
    %c0_i32 = arith.constant 0 : i32
    %c0_i32_0 = arith.constant 0 : i32
    %c0_i32_1 = arith.constant 0 : i32
    %c0_i32_2 = arith.constant 0 : i32
    return %c0_i32, %c0_i32_0, %c0_i32_1 : i32, i32, i32
  }
  func.func @transform_7(%arg0: i32) -> (i32, i32, i32) {
    %c0_i32 = arith.constant 0 : i32
    %c0_i32_0 = arith.constant 0 : i32
    %c0_i32_1 = arith.constant 0 : i32
    %c0_i32_2 = arith.constant 0 : i32
    return %c0_i32, %c0_i32_0, %c0_i32_1 : i32, i32, i32
  }
  func.func @transform_8(%arg0: i32) -> (i32, i32, i32) {
    %c0_i32 = arith.constant 0 : i32
    %c0_i32_0 = arith.constant 0 : i32
    %c0_i32_1 = arith.constant 0 : i32
    %c0_i32_2 = arith.constant 0 : i32
    return %c0_i32, %c0_i32_0, %c0_i32_1 : i32, i32, i32
  }
  func.func @transform_9(%arg0: i32) -> (i32, i32, i32) {
    %c0_i32 = arith.constant 0 : i32
    %c0_i32_0 = arith.constant 0 : i32
    %c0_i32_1 = arith.constant 0 : i32
    %c0_i32_2 = arith.constant 0 : i32
    return %c0_i32, %c0_i32_0, %c0_i32_1 : i32, i32, i32
  }
  func.func @transform_10(%arg0: i32) -> (i32, i32) {
    %c0_i32 = arith.constant 0 : i32
    %c0_i32_0 = arith.constant 0 : i32
    %c0_i32_1 = arith.constant 0 : i32
    return %c0_i32, %c0_i32_0 : i32, i32
  }
  func.func @transform_11(%arg0: i32) -> (i32, i32) {
    %c0_i32 = arith.constant 0 : i32
    %c0_i32_0 = arith.constant 0 : i32
    %c0_i32_1 = arith.constant 0 : i32
    return %c0_i32, %c0_i32_0 : i32, i32
  }
  func.func @transform_12(%arg0: i32) -> (i32, i32) {
    %c0_i32 = arith.constant 0 : i32
    %c0_i32_0 = arith.constant 0 : i32
    %c0_i32_1 = arith.constant 0 : i32
    return %c0_i32, %c0_i32_0 : i32, i32
  }
  func.func @transform_13(%arg0: i32) -> (i32, i32) {
    %c0_i32 = arith.constant 0 : i32
    %c0_i32_0 = arith.constant 0 : i32
    %c0_i32_1 = arith.constant 0 : i32
    return %c0_i32, %c0_i32_0 : i32, i32
  }
  func.func @transform_14(%arg0: i32) -> (i32, i32) {
    %c0_i32 = arith.constant 0 : i32
    %c0_i32_0 = arith.constant 0 : i32
    %c0_i32_1 = arith.constant 0 : i32
    return %c0_i32, %c0_i32_0 : i32, i32
  }
  func.func @transform_15(%arg0: i32) -> (i32, i32) {
    %c0_i32 = arith.constant 0 : i32
    %c0_i32_0 = arith.constant 0 : i32
    %c0_i32_1 = arith.constant 0 : i32
    return %c0_i32, %c0_i32_0 : i32, i32
  }
  func.func @transform_16(%arg0: i32) -> (i32, i32) {
    %c0_i32 = arith.constant 0 : i32
    %c0_i32_0 = arith.constant 0 : i32
    %c0_i32_1 = arith.constant 0 : i32
    return %c0_i32, %c0_i32_0 : i32, i32
  }
  func.func @transform_17(%arg0: i32) -> (i32, i32, i32) {
    %c0_i32 = arith.constant 0 : i32
    %c0_i32_0 = arith.constant 0 : i32
    %c0_i32_1 = arith.constant 0 : i32
    return %arg0, %c0_i32, %c0_i32_0 : i32, i32, i32
  }
}

</mosaic_0001>

<llo_original>
// kernel: tpu_custom_call.1
$region0: #{tpu_custom_call.1}
  #allocation0 [shape = 'u32[]', space=smem, size = 0x4, offset = 0x4, fixed_abs, tag = 'smem constant byte address 0x4 - core index']
  #allocation1 [shape = 'u32[144,128]{1,0:T(1,128)}', space=vmem, size = 0x12000, scoped, tag = 'internal scratch']
  %s0 = inlined_call_operand.vmem [shape: f32[2,8,32], index: 0, kind: input, shape index: {}]
  %s1 = inlined_call_operand.vmem [shape: f32[1,32], index: 1, kind: input, shape index: {}]
  %s2 = inlined_call_operand.vmem [shape: f32[1,32], index: 2, kind: input, shape index: {}]
  %s3 = inlined_call_operand.vmem [shape: bf16[4,32,8], index: 3, kind: input, shape index: {}]
  %s4 = inlined_call_operand.vmem [shape: f32[4,1,8], index: 4, kind: input, shape index: {}]
  %s5 = inlined_call_operand.vmem [shape: bf16[4,32,8], index: 5, kind: input, shape index: {}]
  %s6 = inlined_call_operand.vmem [shape: f32[4,1,8], index: 6, kind: input, shape index: {}]
  %s7 = inlined_call_operand.vmem [shape: bf16[4,32,8], index: 7, kind: input, shape index: {}]
  %s8 = inlined_call_operand.vmem [shape: f32[4,1,8], index: 8, kind: input, shape index: {}]
  %s9 = inlined_call_operand.vmem [shape: bf16[4,8,32], index: 9, kind: input, shape index: {}]
  %s10 = inlined_call_operand.vmem [shape: f32[1,32], index: 10, kind: input, shape index: {}]
  %s11 = inlined_call_operand.vmem [shape: f32[1,32], index: 11, kind: input, shape index: {}]
  %s12 = inlined_call_operand.vmem [shape: f32[1,32], index: 12, kind: input, shape index: {}]
  %s13 = inlined_call_operand.vmem [shape: bf16[32,128], index: 13, kind: input, shape index: {}]
  %s14 = inlined_call_operand.vmem [shape: f32[1,128], index: 14, kind: input, shape index: {}]
  %s15 = inlined_call_operand.vmem [shape: bf16[128,32], index: 15, kind: input, shape index: {}]
  %s16 = inlined_call_operand.vmem [shape: f32[1,32], index: 16, kind: input, shape index: {}]
  %s17 = inlined_call_operand.hbm [shape: f32[2,8,32], index: 17, kind: output, shape index: {}]
  %s18 = sld [smem:[#allocation0]]
  $region101: #{tpu_custom_call.1} parent=0
    _
  %s20 = ssub.s32 1, %s18
  %s21 = scalar_select 0, %s20, %s18
  $region1: #{tpu_custom_call.1} parent=0
    #allocation2 [shape = 'u8[8192]{0}', space=vmem, size = 0x2000, scoped, tag = 'output window, operand 0']
    #allocation3 [shape = 's32[2]{0}', space=sflag, size = 0x8, scoped, tag = 'scoped memory for tpu_custom_call.1']
    %22 = vsyncpa [#allocation3], 0
    %s23 = scalar_lea.sflag [#allocation3], 1
    %24 = vsyncpa %s23, 0
    loop: start=0, step=1, limit=4
    $region2: #{tpu_custom_call.1} parent=1 // loop_pre_header
      _
    $region3: #{tpu_custom_call.1} parent=1 // loop_header
      %s26 = sphi 0, %s30
      %p27 = scmp.ge.s32.totalorder %s26, 4
      %s36 = sphi 0, %s38
      %s39 = sphi 0, %s36
      %s40 = sphi 0, %s39
      %s56 = sphi 0, %s40
      %s60 = sphi 0, %s60
      %s62 = sphi 0, %s60
      %s63 = sphi 0, %s62
      %s77 = sphi 0, %s63
      %s81 = sphi 0, %s81
      %s83 = sphi 0, %s81
      %s84 = sphi 0, %s83
      %s98 = sphi 0, %s84
      %s102 = sphi 0, %s102
      %s104 = sphi 0, %s102
      %s105 = sphi 0, %s104
      %s119 = sphi 0, %s105
      %s123 = sphi 0, %s123
      %s125 = sphi 0, %s123
      %s126 = sphi 0, %s125
      %s140 = sphi 0, %s126
      %s144 = sphi 0, %s144
      %s146 = sphi 0, %s144
      %s147 = sphi 0, %s146
      %s161 = sphi 0, %s147
      %s165 = sphi 0, %s165
      %s167 = sphi 0, %s165
      %s168 = sphi 0, %s167
      %s182 = sphi 0, %s168
      %s186 = sphi 0, %s186
      %s188 = sphi 0, %s186
      %s189 = sphi 0, %s188
      %s203 = sphi 0, %s189
      %s207 = sphi 0, %s207
      %s209 = sphi 0, %s207
      %s210 = sphi 0, %s209
      %s224 = sphi 0, %s210
      %s228 = sphi 0, %s228
      %s230 = sphi 0, %s228
      %s231 = sphi 0, %s230
      %s245 = sphi 0, %s231
      %s249 = sphi 0, %s249
      %s251 = sphi 0, %s249
      %s252 = sphi 0, %s251
      %s266 = sphi 0, %s252
      %s270 = sphi 0, %s270
      %s272 = sphi 0, %s270
      %s273 = sphi 0, %s272
      %s287 = sphi 0, %s273
      %s291 = sphi 0, %s291
      %s293 = sphi 0, %s291
      %s294 = sphi 0, %s293
      %s308 = sphi 0, %s294
      %s312 = sphi 0, %s312
      %s314 = sphi 0, %s312
      %s315 = sphi 0, %s314
      %s329 = sphi 0, %s315
      %s333 = sphi 0, %s333
      %s335 = sphi 0, %s333
      %s336 = sphi 0, %s335
      %s350 = sphi 0, %s336
      %s354 = sphi 0, %s354
      %s356 = sphi 0, %s354
      %s357 = sphi 0, %s356
      %s371 = sphi 0, %s357
      %s375 = sphi 0, %s375
      %s377 = sphi 0, %s375
      %s378 = sphi 0, %s377
      %s392 = sphi 0, %s378
      %s398 = sphi 0, %s400
      %s401 = sphi 0, %s398
      %s402 = sphi 0, %s401
      %s418 = sphi 0, %s402
    $region4: #{tpu_custom_call.1} parent=1 // loop_header_branch
      %29 = sbr.rel (%p27) target = $region8
    $region5: #{tpu_custom_call.1} parent=1 // loop_body
      %s31 = ssub.s32 %s26, 1
      %s32 = ssub.s32 %s26, 2
      %s33 = sadd.s32 %s26, 1
      %s34 = ssub.s32 %s26, %s33
      %p35 = scmp.eq.s32.totalorder %s34, 0
      %s37 = sadd.s32 %s36, 1
      %s38 = scalar_select %p35, %s36, %s37
      %p41 = pneg %p35
      %p42 = scmp.eq.s32.totalorder %s26, 1
      %p43 = por %p41, %p42
      %p44 = scmp.ne.s32.totalorder %s36, %s39
      %p45 = scmp.eq.s32.totalorder %s26, 0
      %p46 = por %p44, %p45
      %p47 = scmp.ne.s32.totalorder %s36, %s39
      %p48 = scmp.eq.s32.totalorder %s31, 1
      %p49 = por %p47, %p48
      %p50 = scmp.ne.s32.totalorder %s39, %s40
      %p51 = scmp.eq.s32.totalorder %s31, 0
      %p52 = por %p50, %p51
      %p53 = scmp.ne.s32.totalorder %s39, %s40
      %p54 = scmp.eq.s32.totalorder %s32, 1
      %p55 = por %p53, %p54
      %p57 = scmp.ne.s32.totalorder %s40, %s56
      %p58 = scmp.eq.s32.totalorder %s32, 0
      %p59 = por %p57, %p58
      %s61 = sadd.s32 %s60, 1
      %p64 = scmp.eq.s32.totalorder %s26, 1
      %p65 = scmp.ne.s32.totalorder %s60, %s62
      %p66 = scmp.eq.s32.totalorder %s26, 0
      %p67 = por %p65, %p66
      %p68 = scmp.ne.s32.totalorder %s60, %s62
      %p69 = scmp.eq.s32.totalorder %s31, 1
      %p70 = por %p68, %p69
      %p71 = scmp.ne.s32.totalorder %s62, %s63
      %p72 = scmp.eq.s32.totalorder %s31, 0
      %p73 = por %p71, %p72
      %p74 = scmp.ne.s32.totalorder %s62, %s63
      %p75 = scmp.eq.s32.totalorder %s32, 1
      %p76 = por %p74, %p75
      %p78 = scmp.ne.s32.totalorder %s63, %s77
      %p79 = scmp.eq.s32.totalorder %s32, 0
      %p80 = por %p78, %p79
      %s82 = sadd.s32 %s81, 1
      %p85 = scmp.eq.s32.totalorder %s26, 1
      %p86 = scmp.ne.s32.totalorder %s81, %s83
      %p87 = scmp.eq.s32.totalorder %s26, 0
      %p88 = por %p86, %p87
      %p89 = scmp.ne.s32.totalorder %s81, %s83
      %p90 = scmp.eq.s32.totalorder %s31, 1
      %p91 = por %p89, %p90
      %p92 = scmp.ne.s32.totalorder %s83, %s84
      %p93 = scmp.eq.s32.totalorder %s31, 0
      %p94 = por %p92, %p93
      %p95 = scmp.ne.s32.totalorder %s83, %s84
      %p96 = scmp.eq.s32.totalorder %s32, 1
      %p97 = por %p95, %p96
      %p99 = scmp.ne.s32.totalorder %s84, %s98
      %p100 = scmp.eq.s32.totalorder %s32, 0
      %p101 = por %p99, %p100
      %s103 = sadd.s32 %s102, 1
      %p106 = scmp.eq.s32.totalorder %s26, 1
      %p107 = scmp.ne.s32.totalorder %s102, %s104
      %p108 = scmp.eq.s32.totalorder %s26, 0
      %p109 = por %p107, %p108
      %p110 = scmp.ne.s32.totalorder %s102, %s104
      %p111 = scmp.eq.s32.totalorder %s31, 1
      %p112 = por %p110, %p111
      %p113 = scmp.ne.s32.totalorder %s104, %s105
      %p114 = scmp.eq.s32.totalorder %s31, 0
      %p115 = por %p113, %p114
      %p116 = scmp.ne.s32.totalorder %s104, %s105
      %p117 = scmp.eq.s32.totalorder %s32, 1
      %p118 = por %p116, %p117
      %p120 = scmp.ne.s32.totalorder %s105, %s119
      %p121 = scmp.eq.s32.totalorder %s32, 0
      %p122 = por %p120, %p121
      %s124 = sadd.s32 %s123, 1
      %p127 = scmp.eq.s32.totalorder %s26, 1
      %p128 = scmp.ne.s32.totalorder %s123, %s125
      %p129 = scmp.eq.s32.totalorder %s26, 0
      %p130 = por %p128, %p129
      %p131 = scmp.ne.s32.totalorder %s123, %s125
      %p132 = scmp.eq.s32.totalorder %s31, 1
      %p133 = por %p131, %p132
      %p134 = scmp.ne.s32.totalorder %s125, %s126
      %p135 = scmp.eq.s32.totalorder %s31, 0
      %p136 = por %p134, %p135
      %p137 = scmp.ne.s32.totalorder %s125, %s126
      %p138 = scmp.eq.s32.totalorder %s32, 1
      %p139 = por %p137, %p138
      %p141 = scmp.ne.s32.totalorder %s126, %s140
      %p142 = scmp.eq.s32.totalorder %s32, 0
      %p143 = por %p141, %p142
      %s145 = sadd.s32 %s144, 1
      %p148 = scmp.eq.s32.totalorder %s26, 1
      %p149 = scmp.ne.s32.totalorder %s144, %s146
      %p150 = scmp.eq.s32.totalorder %s26, 0
      %p151 = por %p149, %p150
      %p152 = scmp.ne.s32.totalorder %s144, %s146
      %p153 = scmp.eq.s32.totalorder %s31, 1
      %p154 = por %p152, %p153
      %p155 = scmp.ne.s32.totalorder %s146, %s147
      %p156 = scmp.eq.s32.totalorder %s31, 0
      %p157 = por %p155, %p156
      %p158 = scmp.ne.s32.totalorder %s146, %s147
      %p159 = scmp.eq.s32.totalorder %s32, 1
      %p160 = por %p158, %p159
      %p162 = scmp.ne.s32.totalorder %s147, %s161
      %p163 = scmp.eq.s32.totalorder %s32, 0
      %p164 = por %p162, %p163
      %s166 = sadd.s32 %s165, 1
      %p169 = scmp.eq.s32.totalorder %s26, 1
      %p170 = scmp.ne.s32.totalorder %s165, %s167
      %p171 = scmp.eq.s32.totalorder %s26, 0
      %p172 = por %p170, %p171
      %p173 = scmp.ne.s32.totalorder %s165, %s167
      %p174 = scmp.eq.s32.totalorder %s31, 1
      %p175 = por %p173, %p174
      %p176 = scmp.ne.s32.totalorder %s167, %s168
      %p177 = scmp.eq.s32.totalorder %s31, 0
      %p178 = por %p176, %p177
      %p179 = scmp.ne.s32.totalorder %s167, %s168
      %p180 = scmp.eq.s32.totalorder %s32, 1
      %p181 = por %p179, %p180
      %p183 = scmp.ne.s32.totalorder %s168, %s182
      %p184 = scmp.eq.s32.totalorder %s32, 0
      %p185 = por %p183, %p184
      %s187 = sadd.s32 %s186, 1
      %p190 = scmp.eq.s32.totalorder %s26, 1
      %p191 = scmp.ne.s32.totalorder %s186, %s188
      %p192 = scmp.eq.s32.totalorder %s26, 0
      %p193 = por %p191, %p192
      %p194 = scmp.ne.s32.totalorder %s186, %s188
      %p195 = scmp.eq.s32.totalorder %s31, 1
      %p196 = por %p194, %p195
      %p197 = scmp.ne.s32.totalorder %s188, %s189
      %p198 = scmp.eq.s32.totalorder %s31, 0
      %p199 = por %p197, %p198
      %p200 = scmp.ne.s32.totalorder %s188, %s189
      %p201 = scmp.eq.s32.totalorder %s32, 1
      %p202 = por %p200, %p201
      %p204 = scmp.ne.s32.totalorder %s189, %s203
      %p205 = scmp.eq.s32.totalorder %s32, 0
      %p206 = por %p204, %p205
      %s208 = sadd.s32 %s207, 1
      %p211 = scmp.eq.s32.totalorder %s26, 1
      %p212 = scmp.ne.s32.totalorder %s207, %s209
      %p213 = scmp.eq.s32.totalorder %s26, 0
      %p214 = por %p212, %p213
      %p215 = scmp.ne.s32.totalorder %s207, %s209
      %p216 = scmp.eq.s32.totalorder %s31, 1
      %p217 = por %p215, %p216
      %p218 = scmp.ne.s32.totalorder %s209, %s210
      %p219 = scmp.eq.s32.totalorder %s31, 0
      %p220 = por %p218, %p219
      %p221 = scmp.ne.s32.totalorder %s209, %s210
      %p222 = scmp.eq.s32.totalorder %s32, 1
      %p223 = por %p221, %p222
      %p225 = scmp.ne.s32.totalorder %s210, %s224
      %p226 = scmp.eq.s32.totalorder %s32, 0
      %p227 = por %p225, %p226
      %s229 = sadd.s32 %s228, 1
      %p232 = scmp.eq.s32.totalorder %s26, 1
      %p233 = scmp.ne.s32.totalorder %s228, %s230
      %p234 = scmp.eq.s32.totalorder %s26, 0
      %p235 = por %p233, %p234
      %p236 = scmp.ne.s32.totalorder %s228, %s230
      %p237 = scmp.eq.s32.totalorder %s31, 1
      %p238 = por %p236, %p237
      %p239 = scmp.ne.s32.totalorder %s230, %s231
      %p240 = scmp.eq.s32.totalorder %s31, 0
      %p241 = por %p239, %p240
      %p242 = scmp.ne.s32.totalorder %s230, %s231
      %p243 = scmp.eq.s32.totalorder %s32, 1
      %p244 = por %p242, %p243
      %p246 = scmp.ne.s32.totalorder %s231, %s245
      %p247 = scmp.eq.s32.totalorder %s32, 0
      %p248 = por %p246, %p247
      %s250 = sadd.s32 %s249, 1
      %p253 = scmp.eq.s32.totalorder %s26, 1
      %p254 = scmp.ne.s32.totalorder %s249, %s251
      %p255 = scmp.eq.s32.totalorder %s26, 0
      %p256 = por %p254, %p255
      %p257 = scmp.ne.s32.totalorder %s249, %s251
      %p258 = scmp.eq.s32.totalorder %s31, 1
      %p259 = por %p257, %p258
      %p260 = scmp.ne.s32.totalorder %s251, %s252
      %p261 = scmp.eq.s32.totalorder %s31, 0
      %p262 = por %p260, %p261
      %p263 = scmp.ne.s32.totalorder %s251, %s252
      %p264 = scmp.eq.s32.totalorder %s32, 1
      %p265 = por %p263, %p264
      %p267 = scmp.ne.s32.totalorder %s252, %s266
      %p268 = scmp.eq.s32.totalorder %s32, 0
      %p269 = por %p267, %p268
      %s271 = sadd.s32 %s270, 1
      %p274 = scmp.eq.s32.totalorder %s26, 1
      %p275 = scmp.ne.s32.totalorder %s270, %s272
      %p276 = scmp.eq.s32.totalorder %s26, 0
      %p277 = por %p275, %p276
      %p278 = scmp.ne.s32.totalorder %s270, %s272
      %p279 = scmp.eq.s32.totalorder %s31, 1
      %p280 = por %p278, %p279
      %p281 = scmp.ne.s32.totalorder %s272, %s273
      %p282 = scmp.eq.s32.totalorder %s31, 0
      %p283 = por %p281, %p282
      %p284 = scmp.ne.s32.totalorder %s272, %s273
      %p285 = scmp.eq.s32.totalorder %s32, 1
      %p286 = por %p284, %p285
      %p288 = scmp.ne.s32.totalorder %s273, %s287
      %p289 = scmp.eq.s32.totalorder %s32, 0
      %p290 = por %p288, %p289
      %s292 = sadd.s32 %s291, 1
      %p295 = scmp.eq.s32.totalorder %s26, 1
      %p296 = scmp.ne.s32.totalorder %s291, %s293
      %p297 = scmp.eq.s32.totalorder %s26, 0
      %p298 = por %p296, %p297
      %p299 = scmp.ne.s32.totalorder %s291, %s293
      %p300 = scmp.eq.s32.totalorder %s31, 1
      %p301 = por %p299, %p300
      %p302 = scmp.ne.s32.totalorder %s293, %s294
      %p303 = scmp.eq.s32.totalorder %s31, 0
      %p304 = por %p302, %p303
      %p305 = scmp.ne.s32.totalorder %s293, %s294
      %p306 = scmp.eq.s32.totalorder %s32, 1
      %p307 = por %p305, %p306
      %p309 = scmp.ne.s32.totalorder %s294, %s308
      %p310 = scmp.eq.s32.totalorder %s32, 0
      %p311 = por %p309, %p310
      %s313 = sadd.s32 %s312, 1
      %p316 = scmp.eq.s32.totalorder %s26, 1
      %p317 = scmp.ne.s32.totalorder %s312, %s314
      %p318 = scmp.eq.s32.totalorder %s26, 0
      %p319 = por %p317, %p318
      %p320 = scmp.ne.s32.totalorder %s312, %s314
      %p321 = scmp.eq.s32.totalorder %s31, 1
      %p322 = por %p320, %p321
      %p323 = scmp.ne.s32.totalorder %s314, %s315
      %p324 = scmp.eq.s32.totalorder %s31, 0
      %p325 = por %p323, %p324
      %p326 = scmp.ne.s32.totalorder %s314, %s315
      %p327 = scmp.eq.s32.totalorder %s32, 1
      %p328 = por %p326, %p327
      %p330 = scmp.ne.s32.totalorder %s315, %s329
      %p331 = scmp.eq.s32.totalorder %s32, 0
      %p332 = por %p330, %p331
      %s334 = sadd.s32 %s333, 1
      %p337 = scmp.eq.s32.totalorder %s26, 1
      %p338 = scmp.ne.s32.totalorder %s333, %s335
      %p339 = scmp.eq.s32.totalorder %s26, 0
      %p340 = por %p338, %p339
      %p341 = scmp.ne.s32.totalorder %s333, %s335
      %p342 = scmp.eq.s32.totalorder %s31, 1
      %p343 = por %p341, %p342
      %p344 = scmp.ne.s32.totalorder %s335, %s336
      %p345 = scmp.eq.s32.totalorder %s31, 0
      %p346 = por %p344, %p345
      %p347 = scmp.ne.s32.totalorder %s335, %s336
      %p348 = scmp.eq.s32.totalorder %s32, 1
      %p349 = por %p347, %p348
      %p351 = scmp.ne.s32.totalorder %s336, %s350
      %p352 = scmp.eq.s32.totalorder %s32, 0
      %p353 = por %p351, %p352
      %s355 = sadd.s32 %s354, 1
      %p358 = scmp.eq.s32.totalorder %s26, 1
      %p359 = scmp.ne.s32.totalorder %s354, %s356
      %p360 = scmp.eq.s32.totalorder %s26, 0
      %p361 = por %p359, %p360
      %p362 = scmp.ne.s32.totalorder %s354, %s356
      %p363 = scmp.eq.s32.totalorder %s31, 1
      %p364 = por %p362, %p363
      %p365 = scmp.ne.s32.totalorder %s356, %s357
      %p366 = scmp.eq.s32.totalorder %s31, 0
      %p367 = por %p365, %p366
      %p368 = scmp.ne.s32.totalorder %s356, %s357
      %p369 = scmp.eq.s32.totalorder %s32, 1
      %p370 = por %p368, %p369
      %p372 = scmp.ne.s32.totalorder %s357, %s371
      %p373 = scmp.eq.s32.totalorder %s32, 0
      %p374 = por %p372, %p373
      %s376 = sadd.s32 %s375, 1
      %p379 = scmp.eq.s32.totalorder %s26, 1
      %p380 = scmp.ne.s32.totalorder %s375, %s377
      %p381 = scmp.eq.s32.totalorder %s26, 0
      %p382 = por %p380, %p381
      %p383 = scmp.ne.s32.totalorder %s375, %s377
      %p384 = scmp.eq.s32.totalorder %s31, 1
      %p385 = por %p383, %p384
      %p386 = scmp.ne.s32.totalorder %s377, %s378
      %p387 = scmp.eq.s32.totalorder %s31, 0
      %p388 = por %p386, %p387
      %p389 = scmp.ne.s32.totalorder %s377, %s378
      %p390 = scmp.eq.s32.totalorder %s32, 1
      %p391 = por %p389, %p390
      %p393 = scmp.ne.s32.totalorder %s378, %s392
      %p394 = scmp.eq.s32.totalorder %s32, 0
      %p395 = por %p393, %p394
      %s396 = ssub.s32 %s26, %s33
      %p397 = scmp.eq.s32.totalorder %s396, 0
      %s399 = sadd.s32 %s398, 1
      %s400 = scalar_select %p397, %s398, %s399
      %p403 = pneg %p397
      %p404 = scmp.eq.s32.totalorder %s26, 1
      %p405 = por %p403, %p404
      %p406 = scmp.ne.s32.totalorder %s398, %s401
      %p407 = scmp.eq.s32.totalorder %s26, 0
      %p408 = por %p406, %p407
      %p409 = scmp.ne.s32.totalorder %s398, %s401
      %p410 = scmp.eq.s32.totalorder %s31, 1
      %p411 = por %p409, %p410
      %p412 = scmp.ne.s32.totalorder %s401, %s402
      %p413 = scmp.eq.s32.totalorder %s31, 0
      %p414 = por %p412, %p413
      %p415 = scmp.ne.s32.totalorder %s401, %s402
      %p416 = scmp.eq.s32.totalorder %s32, 1
      %p417 = por %p415, %p416
      %p419 = scmp.ne.s32.totalorder %s402, %s418
      %p420 = scmp.eq.s32.totalorder %s32, 0
      %p421 = por %p419, %p420
      %p422 = scmp.le.s32.totalorder 1, %s26
      %p423 = scmp.lt.s32.totalorder %s26, 3
      %p424 = pnand %p422, %p423
      %p425 = pneg %p424
      // Predicated region
      $region9: #{tpu_custom_call.1} parent=5 // pred_check
        _
      $region10: #{tpu_custom_call.1} parent=5 // pred_check_branch
        %427 = sbr.rel (%p424) target = $region12
      $region11: #{tpu_custom_call.1} parent=5 // pred_region
        %s428 = ssub.s32 %s26, 1
        // Predicated region
        $region13: #{tpu_custom_call.1} parent=11 // pred_check
          %p429 = pneg %p73
        $region14: #{tpu_custom_call.1} parent=11 // pred_check_branch
          %431 = sbr.rel (%p429) target = $region16
        $region15: #{tpu_custom_call.1} parent=11 // pred_region
          _
        $region16: #{tpu_custom_call.1} parent=11 // pred_fallthru
          _
        // Predicated region
        $region17: #{tpu_custom_call.1} parent=11 // pred_check
          %p432 = pneg %p94
        $region18: #{tpu_custom_call.1} parent=11 // pred_check_branch
          %434 = sbr.rel (%p432) target = $region20
        $region19: #{tpu_custom_call.1} parent=11 // pred_region
          _
        $region20: #{tpu_custom_call.1} parent=11 // pred_fallthru
          _
        // Predicated region
        $region21: #{tpu_custom_call.1} parent=11 // pred_check
          %p435 = pneg %p115
        $region22: #{tpu_custom_call.1} parent=11 // pred_check_branch
          %437 = sbr.rel (%p435) target = $region24
        $region23: #{tpu_custom_call.1} parent=11 // pred_region
          _
        $region24: #{tpu_custom_call.1} parent=11 // pred_fallthru
          _
        // Predicated region
        $region25: #{tpu_custom_call.1} parent=11 // pred_check
          %p438 = pneg %p136
        $region26: #{tpu_custom_call.1} parent=11 // pred_check_branch
          %440 = sbr.rel (%p438) target = $region28
        $region27: #{tpu_custom_call.1} parent=11 // pred_region
          _
        $region28: #{tpu_custom_call.1} parent=11 // pred_fallthru
          _
        // Predicated region
        $region29: #{tpu_custom_call.1} parent=11 // pred_check
          %p441 = pneg %p157
        $region30: #{tpu_custom_call.1} parent=11 // pred_check_branch
          %443 = sbr.rel (%p441) target = $region32
        $region31: #{tpu_custom_call.1} parent=11 // pred_region
          _
        $region32: #{tpu_custom_call.1} parent=11 // pred_fallthru
          _
        // Predicated region
        $region33: #{tpu_custom_call.1} parent=11 // pred_check
          %p444 = pneg %p178
        $region34: #{tpu_custom_call.1} parent=11 // pred_check_branch
          %446 = sbr.rel (%p444) target = $region36
        $region35: #{tpu_custom_call.1} parent=11 // pred_region
          _
        $region36: #{tpu_custom_call.1} parent=11 // pred_fallthru
          _
        // Predicated region
        $region37: #{tpu_custom_call.1} parent=11 // pred_check
          %p447 = pneg %p199
        $region38: #{tpu_custom_call.1} parent=11 // pred_check_branch
          %449 = sbr.rel (%p447) target = $region40
        $region39: #{tpu_custom_call.1} parent=11 // pred_region
          _
        $region40: #{tpu_custom_call.1} parent=11 // pred_fallthru
          _
        // Predicated region
        $region41: #{tpu_custom_call.1} parent=11 // pred_check
          %p450 = pneg %p220
        $region42: #{tpu_custom_call.1} parent=11 // pred_check_branch
          %452 = sbr.rel (%p450) target = $region44
        $region43: #{tpu_custom_call.1} parent=11 // pred_region
          _
        $region44: #{tpu_custom_call.1} parent=11 // pred_fallthru
          _
        // Predicated region
        $region45: #{tpu_custom_call.1} parent=11 // pred_check
          %p453 = pneg %p241
        $region46: #{tpu_custom_call.1} parent=11 // pred_check_branch
          %455 = sbr.rel (%p453) target = $region48
        $region47: #{tpu_custom_call.1} parent=11 // pred_region
          _
        $region48: #{tpu_custom_call.1} parent=11 // pred_fallthru
          _
        // Predicated region
        $region49: #{tpu_custom_call.1} parent=11 // pred_check
          %p456 = pneg %p262
        $region50: #{tpu_custom_call.1} parent=11 // pred_check_branch
          %458 = sbr.rel (%p456) target = $region52
        $region51: #{tpu_custom_call.1} parent=11 // pred_region
          _
        $region52: #{tpu_custom_call.1} parent=11 // pred_fallthru
          _
        // Predicated region
        $region53: #{tpu_custom_call.1} parent=11 // pred_check
          %p459 = pneg %p283
        $region54: #{tpu_custom_call.1} parent=11 // pred_check_branch
          %461 = sbr.rel (%p459) target = $region56
        $region55: #{tpu_custom_call.1} parent=11 // pred_region
          _
        $region56: #{tpu_custom_call.1} parent=11 // pred_fallthru
          _
        // Predicated region
        $region57: #{tpu_custom_call.1} parent=11 // pred_check
          %p462 = pneg %p304
        $region58: #{tpu_custom_call.1} parent=11 // pred_check_branch
          %464 = sbr.rel (%p462) target = $region60
        $region59: #{tpu_custom_call.1} parent=11 // pred_region
          _
        $region60: #{tpu_custom_call.1} parent=11 // pred_fallthru
          _
        // Predicated region
        $region61: #{tpu_custom_call.1} parent=11 // pred_check
          %p465 = pneg %p325
        $region62: #{tpu_custom_call.1} parent=11 // pred_check_branch
          %467 = sbr.rel (%p465) target = $region64
        $region63: #{tpu_custom_call.1} parent=11 // pred_region
          _
        $region64: #{tpu_custom_call.1} parent=11 // pred_fallthru
          _
        // Predicated region
        $region65: #{tpu_custom_call.1} parent=11 // pred_check
          %p468 = pneg %p346
        $region66: #{tpu_custom_call.1} parent=11 // pred_check_branch
          %470 = sbr.rel (%p468) target = $region68
        $region67: #{tpu_custom_call.1} parent=11 // pred_region
          _
        $region68: #{tpu_custom_call.1} parent=11 // pred_fallthru
          _
        // Predicated region
        $region69: #{tpu_custom_call.1} parent=11 // pred_check
          %p471 = pneg %p367
        $region70: #{tpu_custom_call.1} parent=11 // pred_check_branch
          %473 = sbr.rel (%p471) target = $region72
        $region71: #{tpu_custom_call.1} parent=11 // pred_region
          _
        $region72: #{tpu_custom_call.1} parent=11 // pred_fallthru
          _
        // Predicated region
        $region73: #{tpu_custom_call.1} parent=11 // pred_check
          %p474 = pneg %p388
        $region74: #{tpu_custom_call.1} parent=11 // pred_check_branch
          %476 = sbr.rel (%p474) target = $region76
        $region75: #{tpu_custom_call.1} parent=11 // pred_region
          _
        $region76: #{tpu_custom_call.1} parent=11 // pred_fallthru
          _
      $region12: #{tpu_custom_call.1} parent=5 // pred_fallthru
        _
      %p477 = scmp.lt.s32.totalorder %s26, 2
      // Predicated region
      $region77: #{tpu_custom_call.1} parent=5 // pred_check
        %p478 = pneg %p477
      $region78: #{tpu_custom_call.1} parent=5 // pred_check_branch
        %480 = sbr.rel (%p478) target = $region80
      $region79: #{tpu_custom_call.1} parent=5 // pred_region
        // Predicated region
        $region81: #{tpu_custom_call.1} parent=79 // pred_check
          %p481 = pneg %p46
        $region82: #{tpu_custom_call.1} parent=79 // pred_check_branch
          %483 = sbr.rel (%p481) target = $region84
        $region83: #{tpu_custom_call.1} parent=79 // pred_region
          %p484 = scmp.lt.s32.totalorder %s26, 1
          %s485 = scalar_select %p484, %s26, 1
          %s486 = smul.addr %s485, 8
          %s487 = scalar_lea.vmem %s0, %s486
        $region84: #{tpu_custom_call.1} parent=79 // pred_fallthru
          _
      $region80: #{tpu_custom_call.1} parent=5 // pred_fallthru
        _
      %p488 = scmp.le.s32.totalorder 1, %s26
      %p489 = scmp.lt.s32.totalorder %s26, 3
      %p490 = pnand %p488, %p489
      %p491 = pneg %p490
      // Predicated region
      $region85: #{tpu_custom_call.1} parent=5 // pred_check
        _
      $region86: #{tpu_custom_call.1} parent=5 // pred_check_branch
        %493 = sbr.rel (%p490) target = $region88
      $region87: #{tpu_custom_call.1} parent=5 // pred_region
        %s494 = ssub.s32 %s26, 1
        %p495 = scmp.lt.s32.totalorder %s31, 1
        %s496 = scalar_select %p495, %s31, 1
        %s497 = smul.addr %s496, 8
        %s498 = scalar_lea.vmem %s0, %s497
        %p499 = pneg %p52
        %p500 = pneg %p49
        %p501 = pneg %p73
        %p502 = pneg %p70
        %p503 = pneg %p94
        %p504 = pneg %p91
        %p505 = pneg %p115
        %p506 = pneg %p112
        %p507 = pneg %p136
        %p508 = pneg %p133
        %p509 = pneg %p157
        %p510 = pneg %p154
        %p511 = pneg %p178
        %p512 = pneg %p175
        %p513 = pneg %p199
        %p514 = pneg %p196
        %p515 = pneg %p220
        %p516 = pneg %p217
        %p517 = pneg %p241
        %p518 = pneg %p238
        %p519 = pneg %p262
        %p520 = pneg %p259
        %p521 = pneg %p283
        %p522 = pneg %p280
        %p523 = pneg %p304
        %p524 = pneg %p301
        %p525 = pneg %p325
        %p526 = pneg %p322
        %p527 = pneg %p346
        %p528 = pneg %p343
        %p529 = pneg %p367
        %p530 = pneg %p364
        %p531 = pneg %p388
        %p532 = pneg %p385
        %p533 = pneg %p414
        %p534 = pneg %p411
        %s535 = sand.u32 %s401, 1
        %s536 = scalar_lea.sflag [#allocation3], %s535
        %s537 = sand.u32 %s401, 1
        %s538 = smul.addr %s537, 8
        %s539 = scalar_lea.vmem [#allocation2], %s538
        %p540 = scmp.lt.s32.totalorder %s31, 1
        %s541 = scalar_select %p540, %s31, 1
        %s542 = smul.addr %s541, 8
        %s543 = scalar_lea.vmem %s0, %s542
        %v545 = vld [vmem:[%s543] sm:$0xff]
        %v546 = vld [vmem:[%s1] sm:$0x1]
        %v547 = vld [vmem:[%s2] sm:$0x1]
        %vm548 = vcmask 261120
        %v549 = vsel %vm548, %v545, 0.0
        %550 = vadd.xlane.f32.xlu0 %v549
        %v551 = vpop.xlane.xlu0 %550
        %v552 = vrcp.pop 32.0
        %v553 = vmul.f32 %v551, %v552
        %v554 = vsub.f32 %v545, %v553
        %v555 = vmul.f32 %v554, %v554
        %v556 = vsel %vm548, %v555, 0.0
        %557 = vadd.xlane.f32.xlu0 %v556
        %v558 = vpop.xlane.xlu0 %557
        %v559 = vmul.f32 %v558, %v552
        %v560 = vadd.f32 %v559, 1e-05
        %v561 = vrsqrt.pop %v560
        %v562 = vmul.f32 %v554, %v561
        %v564 = vlaneseq
        %v565 = vshrl.u32 %v564, 7
        %v566 = vsub.s32 0, %v565
        %v567 = vrot.slane %v546, %v566
        %v569 = vmul.f32 %v562, %v567
        %v571 = vlaneseq
        %v572 = vshrl.u32 %v571, 7
        %v573 = vsub.s32 0, %v572
        %v574 = vrot.slane %v547, %v573
        %v576 = vadd.f32 %v569, %v574
        %v577 = vpack.c.bf16 %v576, %v576
        %v578 = vld [vmem:[%s3] sm:$0xf]
        %v579 = vld [vmem:[%s3 + $0x4] sm:$0xf]
        %v580 = vld [vmem:[%s3 + $0x8] sm:$0xf]
        %v581 = vld [vmem:[%s3 + $0xc] sm:$0xf]
        %v582 = vld [vmem:[%s3 + $0x10] sm:$0xf]
        %v583 = vld [vmem:[%s3 + $0x14] sm:$0xf]
        %v584 = vld [vmem:[%s3 + $0x18] sm:$0xf]
        %v585 = vld [vmem:[%s3 + $0x1c] sm:$0xf]
        %v586 = vld [vmem:[%s3 + $0x20] sm:$0xf]
        %v587 = vld [vmem:[%s3 + $0x24] sm:$0xf]
        %v588 = vld [vmem:[%s3 + $0x28] sm:$0xf]
        %v589 = vld [vmem:[%s3 + $0x2c] sm:$0xf]
        %v590 = vld [vmem:[%s3 + $0x30] sm:$0xf]
        %v591 = vld [vmem:[%s3 + $0x34] sm:$0xf]
        %v592 = vld [vmem:[%s3 + $0x38] sm:$0xf]
        %v593 = vld [vmem:[%s3 + $0x3c] sm:$0xf]
        %v594 = vld [vmem:[%s4] sm:$0x1]
        %v595 = vld [vmem:[%s4 + $0x1] sm:$0x1]
        %v596 = vld [vmem:[%s4 + $0x2] sm:$0x1]
        %v597 = vld [vmem:[%s4 + $0x3] sm:$0x1]
        %v602 = vlaneseq
        %v603 = vshrl.u32 %v602, 7
        %v604 = vsub.s32 0, %v603
        %v605 = vrot.slane %v594, %v604
        %v606 = vlaneseq
        %v607 = vshrl.u32 %v606, 7
        %v608 = vsub.s32 0, %v607
        %v609 = vrot.slane %v595, %v608
        %v610 = vlaneseq
        %v611 = vshrl.u32 %v610, 7
        %v612 = vsub.s32 0, %v611
        %v613 = vrot.slane %v596, %v612
        %v614 = vlaneseq
        %v615 = vshrl.u32 %v614, 7
        %v616 = vsub.s32 0, %v615
        %v617 = vrot.slane %v597, %v616
        %v626 = vunpack.c.l.b16 %v578
        %v627 = vunpack.c.l.b16 %v579
        %v628 = vunpack.c.l.b16 %v580
        %v629 = vunpack.c.l.b16 %v581
        %v630 = vpack.c.b16 %v627, %v626
        %v631 = vpack.c.b16 %v629, %v628
        %v635 = vsel %vm548, %v577, 0
        %637 = vmatprep.subr.bf16.mxu0 0
        %638 = vmatpush1.bf16.msra.mxu0 %v630
        %639 = vmatprep.subr.bf16.mxu0 0
        %640 = vmatpush1.bf16.msra.mxu0 %v631
        %641 = vmatprep.subr.bf16.mxu0 0
        %642 = vmatpush1.bf16.msra.mxu0 0
        %643 = vmatprep.subr.bf16.mxu0 0
        %644 = vmatpush1.bf16.msra.mxu0 0
        %645 = vmatprep.subr.bf16.mxu0 0
        %646 = vmatpush1.bf16.msra.mxu0 0
        %647 = vmatprep.subr.bf16.mxu0 0
        %648 = vmatpush1.bf16.msra.mxu0 0
        %649 = vmatprep.subr.bf16.mxu0 0
        %650 = vmatpush1.bf16.msra.mxu0 0
        %651 = vmatprep.subr.bf16.mxu0 0
        %652 = vmatpush1.bf16.msra.mxu0 0
        %653 = vmatprep.subr.bf16.mxu0 0
        %654 = vmatpush1.bf16.msra.mxu0 0
        %655 = vmatprep.subr.bf16.mxu0 0
        %656 = vmatpush1.bf16.msra.mxu0 0
        %657 = vmatprep.subr.bf16.mxu0 0
        %658 = vmatpush1.bf16.msra.mxu0 0
        %659 = vmatprep.subr.bf16.mxu0 0
        %660 = vmatpush1.bf16.msra.mxu0 0
        %661 = vmatprep.subr.bf16.mxu0 0
        %662 = vmatpush1.bf16.msra.mxu0 0
        %663 = vmatprep.subr.bf16.mxu0 0
        %664 = vmatpush1.bf16.msra.mxu0 0
        %665 = vmatprep.subr.bf16.mxu0 0
        %666 = vmatpush1.bf16.msra.mxu0 0
        %667 = vmatprep.subr.bf16.mxu0 0
        %668 = vmatpush1.bf16.msra.mxu0 0
        %669 = vmatprep.mubr.bf16.mxu0 0
        %670 = vmatmul.mubr.bf16.gmra.mrb[0].mxu0 %v635
        %v671 = vpop.f32.mrb[0].mxu0
        %v672 = vadd.f32 %v605, %v671
        %v673 = vpop.f32.mrb[0].mxu0
        %v674 = vpop.f32.mrb[0].mxu0
        %v675 = vpop.f32.mrb[0].mxu0
        %676 = vdwg.mxu0
        %v681 = vunpack.c.l.b16 %v582
        %v682 = vunpack.c.l.b16 %v583
        %v683 = vunpack.c.l.b16 %v584
        %v684 = vunpack.c.l.b16 %v585
        %v685 = vpack.c.b16 %v682, %v681
        %v686 = vpack.c.b16 %v684, %v683
        %689 = vmatprep.subr.bf16.mxu0 0
        %690 = vmatpush1.bf16.msra.mxu0 %v685
        %691 = vmatprep.subr.bf16.mxu0 0
        %692 = vmatpush1.bf16.msra.mxu0 %v686
        %693 = vmatprep.subr.bf16.mxu0 0
        %694 = vmatpush1.bf16.msra.mxu0 0
        %695 = vmatprep.subr.bf16.mxu0 0
        %696 = vmatpush1.bf16.msra.mxu0 0
        %697 = vmatprep.subr.bf16.mxu0 0
        %698 = vmatpush1.bf16.msra.mxu0 0
        %699 = vmatprep.subr.bf16.mxu0 0
        %700 = vmatpush1.bf16.msra.mxu0 0
        %701 = vmatprep.subr.bf16.mxu0 0
        %702 = vmatpush1.bf16.msra.mxu0 0
        %703 = vmatprep.subr.bf16.mxu0 0
        %704 = vmatpush1.bf16.msra.mxu0 0
        %705 = vmatprep.subr.bf16.mxu0 0
        %706 = vmatpush1.bf16.msra.mxu0 0
        %707 = vmatprep.subr.bf16.mxu0 0
        %708 = vmatpush1.bf16.msra.mxu0 0
        %709 = vmatprep.subr.bf16.mxu0 0
        %710 = vmatpush1.bf16.msra.mxu0 0
        %711 = vmatprep.subr.bf16.mxu0 0
        %712 = vmatpush1.bf16.msra.mxu0 0
        %713 = vmatprep.subr.bf16.mxu0 0
        %714 = vmatpush1.bf16.msra.mxu0 0
        %715 = vmatprep.subr.bf16.mxu0 0
        %716 = vmatpush1.bf16.msra.mxu0 0
        %717 = vmatprep.subr.bf16.mxu0 0
        %718 = vmatpush1.bf16.msra.mxu0 0
        %719 = vmatprep.subr.bf16.mxu0 0
        %720 = vmatpush1.bf16.msra.mxu0 0
        %721 = vmatprep.mubr.bf16.mxu0 0
        %722 = vmatmul.mubr.bf16.gmra.mrb[0].mxu0 %v635
        %v723 = vpop.f32.mrb[0].mxu0
        %v724 = vadd.f32 %v609, %v723
        %v725 = vpop.f32.mrb[0].mxu0
        %v726 = vpop.f32.mrb[0].mxu0
        %v727 = vpop.f32.mrb[0].mxu0
        %728 = vdwg.mxu0
        %v733 = vunpack.c.l.b16 %v586
        %v734 = vunpack.c.l.b16 %v587
        %v735 = vunpack.c.l.b16 %v588
        %v736 = vunpack.c.l.b16 %v589
        %v737 = vpack.c.b16 %v734, %v733
        %v738 = vpack.c.b16 %v736, %v735
        %741 = vmatprep.subr.bf16.mxu0 0
        %742 = vmatpush1.bf16.msra.mxu0 %v737
        %743 = vmatprep.subr.bf16.mxu0 0
        %744 = vmatpush1.bf16.msra.mxu0 %v738
        %745 = vmatprep.subr.bf16.mxu0 0
        %746 = vmatpush1.bf16.msra.mxu0 0
        %747 = vmatprep.subr.bf16.mxu0 0
        %748 = vmatpush1.bf16.msra.mxu0 0
        %749 = vmatprep.subr.bf16.mxu0 0
        %750 = vmatpush1.bf16.msra.mxu0 0
        %751 = vmatprep.subr.bf16.mxu0 0
        %752 = vmatpush1.bf16.msra.mxu0 0
        %753 = vmatprep.subr.bf16.mxu0 0
        %754 = vmatpush1.bf16.msra.mxu0 0
        %755 = vmatprep.subr.bf16.mxu0 0
        %756 = vmatpush1.bf16.msra.mxu0 0
        %757 = vmatprep.subr.bf16.mxu0 0
        %758 = vmatpush1.bf16.msra.mxu0 0
        %759 = vmatprep.subr.bf16.mxu0 0
        %760 = vmatpush1.bf16.msra.mxu0 0
        %761 = vmatprep.subr.bf16.mxu0 0
        %762 = vmatpush1.bf16.msra.mxu0 0
        %763 = vmatprep.subr.bf16.mxu0 0
        %764 = vmatpush1.bf16.msra.mxu0 0
        %765 = vmatprep.subr.bf16.mxu0 0
        %766 = vmatpush1.bf16.msra.mxu0 0
        %767 = vmatprep.subr.bf16.mxu0 0
        %768 = vmatpush1.bf16.msra.mxu0 0
        %769 = vmatprep.subr.bf16.mxu0 0
        %770 = vmatpush1.bf16.msra.mxu0 0
        %771 = vmatprep.subr.bf16.mxu0 0
        %772 = vmatpush1.bf16.msra.mxu0 0
        %773 = vmatprep.mubr.bf16.mxu0 0
        %774 = vmatmul.mubr.bf16.gmra.mrb[0].mxu0 %v635
        %v775 = vpop.f32.mrb[0].mxu0
        %v776 = vadd.f32 %v613, %v775
        %v777 = vpop.f32.mrb[0].mxu0
        %v778 = vpop.f32.mrb[0].mxu0
        %v779 = vpop.f32.mrb[0].mxu0
        %780 = vdwg.mxu0
        %v785 = vunpack.c.l.b16 %v590
        %v786 = vunpack.c.l.b16 %v591
        %v787 = vunpack.c.l.b16 %v592
        %v788 = vunpack.c.l.b16 %v593
        %v789 = vpack.c.b16 %v786, %v785
        %v790 = vpack.c.b16 %v788, %v787
        %793 = vmatprep.subr.bf16.mxu0 0
        %794 = vmatpush1.bf16.msra.mxu0 %v789
        %795 = vmatprep.subr.bf16.mxu0 0
        %796 = vmatpush1.bf16.msra.mxu0 %v790
        %797 = vmatprep.subr.bf16.mxu0 0
        %798 = vmatpush1.bf16.msra.mxu0 0
        %799 = vmatprep.subr.bf16.mxu0 0
        %800 = vmatpush1.bf16.msra.mxu0 0
        %801 = vmatprep.subr.bf16.mxu0 0
        %802 = vmatpush1.bf16.msra.mxu0 0
        %803 = vmatprep.subr.bf16.mxu0 0
        %804 = vmatpush1.bf16.msra.mxu0 0
        %805 = vmatprep.subr.bf16.mxu0 0
        %806 = vmatpush1.bf16.msra.mxu0 0
        %807 = vmatprep.subr.bf16.mxu0 0
        %808 = vmatpush1.bf16.msra.mxu0 0
        %809 = vmatprep.subr.bf16.mxu0 0
        %810 = vmatpush1.bf16.msra.mxu0 0
        %811 = vmatprep.subr.bf16.mxu0 0
        %812 = vmatpush1.bf16.msra.mxu0 0
        %813 = vmatprep.subr.bf16.mxu0 0
        %814 = vmatpush1.bf16.msra.mxu0 0
        %815 = vmatprep.subr.bf16.mxu0 0
        %816 = vmatpush1.bf16.msra.mxu0 0
        %817 = vmatprep.subr.bf16.mxu0 0
        %818 = vmatpush1.bf16.msra.mxu0 0
        %819 = vmatprep.subr.bf16.mxu0 0
        %820 = vmatpush1.bf16.msra.mxu0 0
        %821 = vmatprep.subr.bf16.mxu0 0
        %822 = vmatpush1.bf16.msra.mxu0 0
        %823 = vmatprep.subr.bf16.mxu0 0
        %824 = vmatpush1.bf16.msra.mxu0 0
        %825 = vmatprep.mubr.bf16.mxu0 0
        %826 = vmatmul.mubr.bf16.gmra.mrb[0].mxu0 %v635
        %v827 = vpop.f32.mrb[0].mxu0
        %v828 = vadd.f32 %v617, %v827
        %v829 = vpop.f32.mrb[0].mxu0
        %v830 = vpop.f32.mrb[0].mxu0
        %v831 = vpop.f32.mrb[0].mxu0
        %832 = vdwg.mxu0
        %v833 = vld [vmem:[%s5] sm:$0xf]
        %v834 = vld [vmem:[%s5 + $0x4] sm:$0xf]
        %v835 = vld [vmem:[%s5 + $0x8] sm:$0xf]
        %v836 = vld [vmem:[%s5 + $0xc] sm:$0xf]
        %v837 = vld [vmem:[%s5 + $0x10] sm:$0xf]
        %v838 = vld [vmem:[%s5 + $0x14] sm:$0xf]
        %v839 = vld [vmem:[%s5 + $0x18] sm:$0xf]
        %v840 = vld [vmem:[%s5 + $0x1c] sm:$0xf]
        %v841 = vld [vmem:[%s5 + $0x20] sm:$0xf]
        %v842 = vld [vmem:[%s5 + $0x24] sm:$0xf]
        %v843 = vld [vmem:[%s5 + $0x28] sm:$0xf]
        %v844 = vld [vmem:[%s5 + $0x2c] sm:$0xf]
        %v845 = vld [vmem:[%s5 + $0x30] sm:$0xf]
        %v846 = vld [vmem:[%s5 + $0x34] sm:$0xf]
        %v847 = vld [vmem:[%s5 + $0x38] sm:$0xf]
        %v848 = vld [vmem:[%s5 + $0x3c] sm:$0xf]
        %v849 = vld [vmem:[%s6] sm:$0x1]
        %v850 = vld [vmem:[%s6 + $0x1] sm:$0x1]
        %v851 = vld [vmem:[%s6 + $0x2] sm:$0x1]
        %v852 = vld [vmem:[%s6 + $0x3] sm:$0x1]
        %v857 = vlaneseq
        %v858 = vshrl.u32 %v857, 7
        %v859 = vsub.s32 0, %v858
        %v860 = vrot.slane %v849, %v859
        %v861 = vlaneseq
        %v862 = vshrl.u32 %v861, 7
        %v863 = vsub.s32 0, %v862
        %v864 = vrot.slane %v850, %v863
        %v865 = vlaneseq
        %v866 = vshrl.u32 %v865, 7
        %v867 = vsub.s32 0, %v866
        %v868 = vrot.slane %v851, %v867
        %v869 = vlaneseq
        %v870 = vshrl.u32 %v869, 7
        %v871 = vsub.s32 0, %v870
        %v872 = vrot.slane %v852, %v871
        %v881 = vunpack.c.l.b16 %v833
        %v882 = vunpack.c.l.b16 %v834
        %v883 = vunpack.c.l.b16 %v835
        %v884 = vunpack.c.l.b16 %v836
        %v885 = vpack.c.b16 %v882, %v881
        %v886 = vpack.c.b16 %v884, %v883
        %889 = vmatprep.subr.bf16.mxu0 0
        %890 = vmatpush1.bf16.msra.mxu0 %v885
        %891 = vmatprep.subr.bf16.mxu0 0
        %892 = vmatpush1.bf16.msra.mxu0 %v886
        %893 = vmatprep.subr.bf16.mxu0 0
        %894 = vmatpush1.bf16.msra.mxu0 0
        %895 = vmatprep.subr.bf16.mxu0 0
        %896 = vmatpush1.bf16.msra.mxu0 0
        %897 = vmatprep.subr.bf16.mxu0 0
        %898 = vmatpush1.bf16.msra.mxu0 0
        %899 = vmatprep.subr.bf16.mxu0 0
        %900 = vmatpush1.bf16.msra.mxu0 0
        %901 = vmatprep.subr.bf16.mxu0 0
        %902 = vmatpush1.bf16.msra.mxu0 0
        %903 = vmatprep.subr.bf16.mxu0 0
        %904 = vmatpush1.bf16.msra.mxu0 0
        %905 = vmatprep.subr.bf16.mxu0 0
        %906 = vmatpush1.bf16.msra.mxu0 0
        %907 = vmatprep.subr.bf16.mxu0 0
        %908 = vmatpush1.bf16.msra.mxu0 0
        %909 = vmatprep.subr.bf16.mxu0 0
        %910 = vmatpush1.bf16.msra.mxu0 0
        %911 = vmatprep.subr.bf16.mxu0 0
        %912 = vmatpush1.bf16.msra.mxu0 0
        %913 = vmatprep.subr.bf16.mxu0 0
        %914 = vmatpush1.bf16.msra.mxu0 0
        %915 = vmatprep.subr.bf16.mxu0 0
        %916 = vmatpush1.bf16.msra.mxu0 0
        %917 = vmatprep.subr.bf16.mxu0 0
        %918 = vmatpush1.bf16.msra.mxu0 0
        %919 = vmatprep.subr.bf16.mxu0 0
        %920 = vmatpush1.bf16.msra.mxu0 0
        %921 = vmatprep.mubr.bf16.mxu0 0
        %922 = vmatmul.mubr.bf16.gmra.mrb[0].mxu0 %v635
        %v923 = vpop.f32.mrb[0].mxu0
        %v924 = vadd.f32 %v860, %v923
        %v925 = vpop.f32.mrb[0].mxu0
        %v926 = vpop.f32.mrb[0].mxu0
        %v927 = vpop.f32.mrb[0].mxu0
        %928 = vdwg.mxu0
        %v933 = vunpack.c.l.b16 %v837
        %v934 = vunpack.c.l.b16 %v838
        %v935 = vunpack.c.l.b16 %v839
        %v936 = vunpack.c.l.b16 %v840
        %v937 = vpack.c.b16 %v934, %v933
        %v938 = vpack.c.b16 %v936, %v935
        %941 = vmatprep.subr.bf16.mxu0 0
        %942 = vmatpush1.bf16.msra.mxu0 %v937
        %943 = vmatprep.subr.bf16.mxu0 0
        %944 = vmatpush1.bf16.msra.mxu0 %v938
        %945 = vmatprep.subr.bf16.mxu0 0
        %946 = vmatpush1.bf16.msra.mxu0 0
        %947 = vmatprep.subr.bf16.mxu0 0
        %948 = vmatpush1.bf16.msra.mxu0 0
        %949 = vmatprep.subr.bf16.mxu0 0
        %950 = vmatpush1.bf16.msra.mxu0 0
        %951 = vmatprep.subr.bf16.mxu0 0
        %952 = vmatpush1.bf16.msra.mxu0 0
        %953 = vmatprep.subr.bf16.mxu0 0
        %954 = vmatpush1.bf16.msra.mxu0 0
        %955 = vmatprep.subr.bf16.mxu0 0
        %956 = vmatpush1.bf16.msra.mxu0 0
        %957 = vmatprep.subr.bf16.mxu0 0
        %958 = vmatpush1.bf16.msra.mxu0 0
        %959 = vmatprep.subr.bf16.mxu0 0
        %960 = vmatpush1.bf16.msra.mxu0 0
        %961 = vmatprep.subr.bf16.mxu0 0
        %962 = vmatpush1.bf16.msra.mxu0 0
        %963 = vmatprep.subr.bf16.mxu0 0
        %964 = vmatpush1.bf16.msra.mxu0 0
        %965 = vmatprep.subr.bf16.mxu0 0
        %966 = vmatpush1.bf16.msra.mxu0 0
        %967 = vmatprep.subr.bf16.mxu0 0
        %968 = vmatpush1.bf16.msra.mxu0 0
        %969 = vmatprep.subr.bf16.mxu0 0
        %970 = vmatpush1.bf16.msra.mxu0 0
        %971 = vmatprep.subr.bf16.mxu0 0
        %972 = vmatpush1.bf16.msra.mxu0 0
        %973 = vmatprep.mubr.bf16.mxu0 0
        %974 = vmatmul.mubr.bf16.gmra.mrb[0].mxu0 %v635
        %v975 = vpop.f32.mrb[0].mxu0
        %v976 = vadd.f32 %v864, %v975
        %v977 = vpop.f32.mrb[0].mxu0
        %v978 = vpop.f32.mrb[0].mxu0
        %v979 = vpop.f32.mrb[0].mxu0
        %980 = vdwg.mxu0
        %v985 = vunpack.c.l.b16 %v841
        %v986 = vunpack.c.l.b16 %v842
        %v987 = vunpack.c.l.b16 %v843
        %v988 = vunpack.c.l.b16 %v844
        %v989 = vpack.c.b16 %v986, %v985
        %v990 = vpack.c.b16 %v988, %v987
        %993 = vmatprep.subr.bf16.mxu0 0
        %994 = vmatpush1.bf16.msra.mxu0 %v989
        %995 = vmatprep.subr.bf16.mxu0 0
        %996 = vmatpush1.bf16.msra.mxu0 %v990
        %997 = vmatprep.subr.bf16.mxu0 0
        %998 = vmatpush1.bf16.msra.mxu0 0
        %999 = vmatprep.subr.bf16.mxu0 0
        %1000 = vmatpush1.bf16.msra.mxu0 0
        %1001 = vmatprep.subr.bf16.mxu0 0
        %1002 = vmatpush1.bf16.msra.mxu0 0
        %1003 = vmatprep.subr.bf16.mxu0 0
        %1004 = vmatpush1.bf16.msra.mxu0 0
        %1005 = vmatprep.subr.bf16.mxu0 0
        %1006 = vmatpush1.bf16.msra.mxu0 0
        %1007 = vmatprep.subr.bf16.mxu0 0
        %1008 = vmatpush1.bf16.msra.mxu0 0
        %1009 = vmatprep.subr.bf16.mxu0 0
        %1010 = vmatpush1.bf16.msra.mxu0 0
        %1011 = vmatprep.subr.bf16.mxu0 0
        %1012 = vmatpush1.bf16.msra.mxu0 0
        %1013 = vmatprep.subr.bf16.mxu0 0
        %1014 = vmatpush1.bf16.msra.mxu0 0
        %1015 = vmatprep.subr.bf16.mxu0 0
        %1016 = vmatpush1.bf16.msra.mxu0 0
        %1017 = vmatprep.subr.bf16.mxu0 0
        %1018 = vmatpush1.bf16.msra.mxu0 0
        %1019 = vmatprep.subr.bf16.mxu0 0
        %1020 = vmatpush1.bf16.msra.mxu0 0
        %1021 = vmatprep.subr.bf16.mxu0 0
        %1022 = vmatpush1.bf16.msra.mxu0 0
        %1023 = vmatprep.subr.bf16.mxu0 0
        %1024 = vmatpush1.bf16.msra.mxu0 0
        %1025 = vmatprep.mubr.bf16.mxu0 0
        %1026 = vmatmul.mubr.bf16.gmra.mrb[0].mxu0 %v635
        %v1027 = vpop.f32.mrb[0].mxu0
        %v1028 = vadd.f32 %v868, %v1027
        %v1029 = vpop.f32.mrb[0].mxu0
        %v1030 = vpop.f32.mrb[0].mxu0
        %v1031 = vpop.f32.mrb[0].mxu0
        %1032 = vdwg.mxu0
        %v1037 = vunpack.c.l.b16 %v845
        %v1038 = vunpack.c.l.b16 %v846
        %v1039 = vunpack.c.l.b16 %v847
        %v1040 = vunpack.c.l.b16 %v848
        %v1041 = vpack.c.b16 %v1038, %v1037
        %v1042 = vpack.c.b16 %v1040, %v1039
        %1045 = vmatprep.subr.bf16.mxu0 0
        %1046 = vmatpush1.bf16.msra.mxu0 %v1041
        %1047 = vmatprep.subr.bf16.mxu0 0
        %1048 = vmatpush1.bf16.msra.mxu0 %v1042
        %1049 = vmatprep.subr.bf16.mxu0 0
        %1050 = vmatpush1.bf16.msra.mxu0 0
        %1051 = vmatprep.subr.bf16.mxu0 0
        %1052 = vmatpush1.bf16.msra.mxu0 0
        %1053 = vmatprep.subr.bf16.mxu0 0
        %1054 = vmatpush1.bf16.msra.mxu0 0
        %1055 = vmatprep.subr.bf16.mxu0 0
        %1056 = vmatpush1.bf16.msra.mxu0 0
        %1057 = vmatprep.subr.bf16.mxu0 0
        %1058 = vmatpush1.bf16.msra.mxu0 0
        %1059 = vmatprep.subr.bf16.mxu0 0
        %1060 = vmatpush1.bf16.msra.mxu0 0
        %1061 = vmatprep.subr.bf16.mxu0 0
        %1062 = vmatpush1.bf16.msra.mxu0 0
        %1063 = vmatprep.subr.bf16.mxu0 0
        %1064 = vmatpush1.bf16.msra.mxu0 0
        %1065 = vmatprep.subr.bf16.mxu0 0
        %1066 = vmatpush1.bf16.msra.mxu0 0
        %1067 = vmatprep.subr.bf16.mxu0 0
        %1068 = vmatpush1.bf16.msra.mxu0 0
        %1069 = vmatprep.subr.bf16.mxu0 0
        %1070 = vmatpush1.bf16.msra.mxu0 0
        %1071 = vmatprep.subr.bf16.mxu0 0
        %1072 = vmatpush1.bf16.msra.mxu0 0
        %1073 = vmatprep.subr.bf16.mxu0 0
        %1074 = vmatpush1.bf16.msra.mxu0 0
        %1075 = vmatprep.subr.bf16.mxu0 0
        %1076 = vmatpush1.bf16.msra.mxu0 0
        %1077 = vmatprep.mubr.bf16.mxu0 0
        %1078 = vmatmul.mubr.bf16.gmra.mrb[0].mxu0 %v635
        %v1079 = vpop.f32.mrb[0].mxu0
        %v1080 = vadd.f32 %v872, %v1079
        %v1081 = vpop.f32.mrb[0].mxu0
        %v1082 = vpop.f32.mrb[0].mxu0
        %v1083 = vpop.f32.mrb[0].mxu0
        %1084 = vdwg.mxu0
        %v1085 = vld [vmem:[%s7] sm:$0xf]
        %v1086 = vld [vmem:[%s7 + $0x4] sm:$0xf]
        %v1087 = vld [vmem:[%s7 + $0x8] sm:$0xf]
        %v1088 = vld [vmem:[%s7 + $0xc] sm:$0xf]
        %v1089 = vld [vmem:[%s7 + $0x10] sm:$0xf]
        %v1090 = vld [vmem:[%s7 + $0x14] sm:$0xf]
        %v1091 = vld [vmem:[%s7 + $0x18] sm:$0xf]
        %v1092 = vld [vmem:[%s7 + $0x1c] sm:$0xf]
        %v1093 = vld [vmem:[%s7 + $0x20] sm:$0xf]
        %v1094 = vld [vmem:[%s7 + $0x24] sm:$0xf]
        %v1095 = vld [vmem:[%s7 + $0x28] sm:$0xf]
        %v1096 = vld [vmem:[%s7 + $0x2c] sm:$0xf]
        %v1097 = vld [vmem:[%s7 + $0x30] sm:$0xf]
        %v1098 = vld [vmem:[%s7 + $0x34] sm:$0xf]
        %v1099 = vld [vmem:[%s7 + $0x38] sm:$0xf]
        %v1100 = vld [vmem:[%s7 + $0x3c] sm:$0xf]
        %v1101 = vld [vmem:[%s8] sm:$0x1]
        %v1102 = vld [vmem:[%s8 + $0x1] sm:$0x1]
        %v1103 = vld [vmem:[%s8 + $0x2] sm:$0x1]
        %v1104 = vld [vmem:[%s8 + $0x3] sm:$0x1]
        %v1109 = vlaneseq
        %v1110 = vshrl.u32 %v1109, 7
        %v1111 = vsub.s32 0, %v1110
        %v1112 = vrot.slane %v1101, %v1111
        %v1113 = vlaneseq
        %v1114 = vshrl.u32 %v1113, 7
        %v1115 = vsub.s32 0, %v1114
        %v1116 = vrot.slane %v1102, %v1115
        %v1117 = vlaneseq
        %v1118 = vshrl.u32 %v1117, 7
        %v1119 = vsub.s32 0, %v1118
        %v1120 = vrot.slane %v1103, %v1119
        %v1121 = vlaneseq
        %v1122 = vshrl.u32 %v1121, 7
        %v1123 = vsub.s32 0, %v1122
        %v1124 = vrot.slane %v1104, %v1123
        %v1133 = vunpack.c.l.b16 %v1085
        %v1134 = vunpack.c.l.b16 %v1086
        %v1135 = vunpack.c.l.b16 %v1087
        %v1136 = vunpack.c.l.b16 %v1088
        %v1137 = vpack.c.b16 %v1134, %v1133
        %v1138 = vpack.c.b16 %v1136, %v1135
        %1141 = vmatprep.subr.bf16.mxu0 0
        %1142 = vmatpush1.bf16.msra.mxu0 %v1137
        %1143 = vmatprep.subr.bf16.mxu0 0
        %1144 = vmatpush1.bf16.msra.mxu0 %v1138
        %1145 = vmatprep.subr.bf16.mxu0 0
        %1146 = vmatpush1.bf16.msra.mxu0 0
        %1147 = vmatprep.subr.bf16.mxu0 0
        %1148 = vmatpush1.bf16.msra.mxu0 0
        %1149 = vmatprep.subr.bf16.mxu0 0
        %1150 = vmatpush1.bf16.msra.mxu0 0
        %1151 = vmatprep.subr.bf16.mxu0 0
        %1152 = vmatpush1.bf16.msra.mxu0 0
        %1153 = vmatprep.subr.bf16.mxu0 0
        %1154 = vmatpush1.bf16.msra.mxu0 0
        %1155 = vmatprep.subr.bf16.mxu0 0
        %1156 = vmatpush1.bf16.msra.mxu0 0
        %1157 = vmatprep.subr.bf16.mxu0 0
        %1158 = vmatpush1.bf16.msra.mxu0 0
        %1159 = vmatprep.subr.bf16.mxu0 0
        %1160 = vmatpush1.bf16.msra.mxu0 0
        %1161 = vmatprep.subr.bf16.mxu0 0
        %1162 = vmatpush1.bf16.msra.mxu0 0
        %1163 = vmatprep.subr.bf16.mxu0 0
        %1164 = vmatpush1.bf16.msra.mxu0 0
        %1165 = vmatprep.subr.bf16.mxu0 0
        %1166 = vmatpush1.bf16.msra.mxu0 0
        %1167 = vmatprep.subr.bf16.mxu0 0
        %1168 = vmatpush1.bf16.msra.mxu0 0
        %1169 = vmatprep.subr.bf16.mxu0 0
        %1170 = vmatpush1.bf16.msra.mxu0 0
        %1171 = vmatprep.subr.bf16.mxu0 0
        %1172 = vmatpush1.bf16.msra.mxu0 0
        %1173 = vmatprep.mubr.bf16.mxu0 0
        %1174 = vmatmul.mubr.bf16.gmra.mrb[0].mxu0 %v635
        %v1175 = vpop.f32.mrb[0].mxu0
        %v1176 = vadd.f32 %v1112, %v1175
        %v1177 = vpop.f32.mrb[0].mxu0
        %v1178 = vpop.f32.mrb[0].mxu0
        %v1179 = vpop.f32.mrb[0].mxu0
        %1180 = vdwg.mxu0
        %v1185 = vunpack.c.l.b16 %v1089
        %v1186 = vunpack.c.l.b16 %v1090
        %v1187 = vunpack.c.l.b16 %v1091
        %v1188 = vunpack.c.l.b16 %v1092
        %v1189 = vpack.c.b16 %v1186, %v1185
        %v1190 = vpack.c.b16 %v1188, %v1187
        %1193 = vmatprep.subr.bf16.mxu0 0
        %1194 = vmatpush1.bf16.msra.mxu0 %v1189
        %1195 = vmatprep.subr.bf16.mxu0 0
        %1196 = vmatpush1.bf16.msra.mxu0 %v1190
        %1197 = vmatprep.subr.bf16.mxu0 0
        %1198 = vmatpush1.bf16.msra.mxu0 0
        %1199 = vmatprep.subr.bf16.mxu0 0
        %1200 = vmatpush1.bf16.msra.mxu0 0
        %1201 = vmatprep.subr.bf16.mxu0 0
        %1202 = vmatpush1.bf16.msra.mxu0 0
        %1203 = vmatprep.subr.bf16.mxu0 0
        %1204 = vmatpush1.bf16.msra.mxu0 0
        %1205 = vmatprep.subr.bf16.mxu0 0
        %1206 = vmatpush1.bf16.msra.mxu0 0
        %1207 = vmatprep.subr.bf16.mxu0 0
        %1208 = vmatpush1.bf16.msra.mxu0 0
        %1209 = vmatprep.subr.bf16.mxu0 0
        %1210 = vmatpush1.bf16.msra.mxu0 0
        %1211 = vmatprep.subr.bf16.mxu0 0
        %1212 = vmatpush1.bf16.msra.mxu0 0
        %1213 = vmatprep.subr.bf16.mxu0 0
        %1214 = vmatpush1.bf16.msra.mxu0 0
        %1215 = vmatprep.subr.bf16.mxu0 0
        %1216 = vmatpush1.bf16.msra.mxu0 0
        %1217 = vmatprep.subr.bf16.mxu0 0
        %1218 = vmatpush1.bf16.msra.mxu0 0
        %1219 = vmatprep.subr.bf16.mxu0 0
        %1220 = vmatpush1.bf16.msra.mxu0 0
        %1221 = vmatprep.subr.bf16.mxu0 0
        %1222 = vmatpush1.bf16.msra.mxu0 0
        %1223 = vmatprep.subr.bf16.mxu0 0
        %1224 = vmatpush1.bf16.msra.mxu0 0
        %1225 = vmatprep.mubr.bf16.mxu0 0
        %1226 = vmatmul.mubr.bf16.gmra.mrb[0].mxu0 %v635
        %v1227 = vpop.f32.mrb[0].mxu0
        %v1228 = vadd.f32 %v1116, %v1227
        %v1229 = vpop.f32.mrb[0].mxu0
        %v1230 = vpop.f32.mrb[0].mxu0
        %v1231 = vpop.f32.mrb[0].mxu0
        %1232 = vdwg.mxu0
        %v1237 = vunpack.c.l.b16 %v1093
        %v1238 = vunpack.c.l.b16 %v1094
        %v1239 = vunpack.c.l.b16 %v1095
        %v1240 = vunpack.c.l.b16 %v1096
        %v1241 = vpack.c.b16 %v1238, %v1237
        %v1242 = vpack.c.b16 %v1240, %v1239
        %1245 = vmatprep.subr.bf16.mxu0 0
        %1246 = vmatpush1.bf16.msra.mxu0 %v1241
        %1247 = vmatprep.subr.bf16.mxu0 0
        %1248 = vmatpush1.bf16.msra.mxu0 %v1242
        %1249 = vmatprep.subr.bf16.mxu0 0
        %1250 = vmatpush1.bf16.msra.mxu0 0
        %1251 = vmatprep.subr.bf16.mxu0 0
        %1252 = vmatpush1.bf16.msra.mxu0 0
        %1253 = vmatprep.subr.bf16.mxu0 0
        %1254 = vmatpush1.bf16.msra.mxu0 0
        %1255 = vmatprep.subr.bf16.mxu0 0
        %1256 = vmatpush1.bf16.msra.mxu0 0
        %1257 = vmatprep.subr.bf16.mxu0 0
        %1258 = vmatpush1.bf16.msra.mxu0 0
        %1259 = vmatprep.subr.bf16.mxu0 0
        %1260 = vmatpush1.bf16.msra.mxu0 0
        %1261 = vmatprep.subr.bf16.mxu0 0
        %1262 = vmatpush1.bf16.msra.mxu0 0
        %1263 = vmatprep.subr.bf16.mxu0 0
        %1264 = vmatpush1.bf16.msra.mxu0 0
        %1265 = vmatprep.subr.bf16.mxu0 0
        %1266 = vmatpush1.bf16.msra.mxu0 0
        %1267 = vmatprep.subr.bf16.mxu0 0
        %1268 = vmatpush1.bf16.msra.mxu0 0
        %1269 = vmatprep.subr.bf16.mxu0 0
        %1270 = vmatpush1.bf16.msra.mxu0 0
        %1271 = vmatprep.subr.bf16.mxu0 0
        %1272 = vmatpush1.bf16.msra.mxu0 0
        %1273 = vmatprep.subr.bf16.mxu0 0
        %1274 = vmatpush1.bf16.msra.mxu0 0
        %1275 = vmatprep.subr.bf16.mxu0 0
        %1276 = vmatpush1.bf16.msra.mxu0 0
        %1277 = vmatprep.mubr.bf16.mxu0 0
        %1278 = vmatmul.mubr.bf16.gmra.mrb[0].mxu0 %v635
        %v1279 = vpop.f32.mrb[0].mxu0
        %v1280 = vadd.f32 %v1120, %v1279
        %v1281 = vpop.f32.mrb[0].mxu0
        %v1282 = vpop.f32.mrb[0].mxu0
        %v1283 = vpop.f32.mrb[0].mxu0
        %1284 = vdwg.mxu0
        %v1289 = vunpack.c.l.b16 %v1097
        %v1290 = vunpack.c.l.b16 %v1098
        %v1291 = vunpack.c.l.b16 %v1099
        %v1292 = vunpack.c.l.b16 %v1100
        %v1293 = vpack.c.b16 %v1290, %v1289
        %v1294 = vpack.c.b16 %v1292, %v1291
        %1297 = vmatprep.subr.bf16.mxu0 0
        %1298 = vmatpush1.bf16.msra.mxu0 %v1293
        %1299 = vmatprep.subr.bf16.mxu0 0
        %1300 = vmatpush1.bf16.msra.mxu0 %v1294
        %1301 = vmatprep.subr.bf16.mxu0 0
        %1302 = vmatpush1.bf16.msra.mxu0 0
        %1303 = vmatprep.subr.bf16.mxu0 0
        %1304 = vmatpush1.bf16.msra.mxu0 0
        %1305 = vmatprep.subr.bf16.mxu0 0
        %1306 = vmatpush1.bf16.msra.mxu0 0
        %1307 = vmatprep.subr.bf16.mxu0 0
        %1308 = vmatpush1.bf16.msra.mxu0 0
        %1309 = vmatprep.subr.bf16.mxu0 0
        %1310 = vmatpush1.bf16.msra.mxu0 0
        %1311 = vmatprep.subr.bf16.mxu0 0
        %1312 = vmatpush1.bf16.msra.mxu0 0
        %1313 = vmatprep.subr.bf16.mxu0 0
        %1314 = vmatpush1.bf16.msra.mxu0 0
        %1315 = vmatprep.subr.bf16.mxu0 0
        %1316 = vmatpush1.bf16.msra.mxu0 0
        %1317 = vmatprep.subr.bf16.mxu0 0
        %1318 = vmatpush1.bf16.msra.mxu0 0
        %1319 = vmatprep.subr.bf16.mxu0 0
        %1320 = vmatpush1.bf16.msra.mxu0 0
        %1321 = vmatprep.subr.bf16.mxu0 0
        %1322 = vmatpush1.bf16.msra.mxu0 0
        %1323 = vmatprep.subr.bf16.mxu0 0
        %1324 = vmatpush1.bf16.msra.mxu0 0
        %1325 = vmatprep.subr.bf16.mxu0 0
        %1326 = vmatpush1.bf16.msra.mxu0 0
        %1327 = vmatprep.subr.bf16.mxu0 0
        %1328 = vmatpush1.bf16.msra.mxu0 0
        %1329 = vmatprep.mubr.bf16.mxu0 0
        %1330 = vmatmul.mubr.bf16.gmra.mrb[0].mxu0 %v635
        %v1331 = vpop.f32.mrb[0].mxu0
        %v1332 = vadd.f32 %v1124, %v1331
        %v1333 = vpop.f32.mrb[0].mxu0
        %v1334 = vpop.f32.mrb[0].mxu0
        %v1335 = vpop.f32.mrb[0].mxu0
        %1336 = vdwg.mxu0
        %v1337 = vmul.f32 %v672, 0.35355338
        %v1338 = vmul.f32 %v724, 0.35355338
        %v1339 = vmul.f32 %v776, 0.35355338
        %v1340 = vmul.f32 %v828, 0.35355338
        %v1341 = vlaneseq
        %v1342 = vshrl.u32 %v1341, 7
        %v1343 = vlaneseq
        %v1344 = vand.u32 %v1343, 127
        %vm1345 = vcmp.ge.s32.totalorder %v1342, %v1344
        %v1346 = vpack.c.bf16 %v1337, %v1337
        %v1347 = vpack.c.bf16 %v1338, %v1338
        %v1348 = vpack.c.bf16 %v1339, %v1339
        %v1349 = vpack.c.bf16 %v1340, %v1340
        %v1350 = vpack.c.bf16 %v924, %v924
        %v1351 = vpack.c.bf16 %v976, %v976
        %v1352 = vpack.c.bf16 %v1028, %v1028
        %v1353 = vpack.c.bf16 %v1080, %v1080
        %vm1354 = vcmask 64512
        %v1356 = vsel %vm1354, %v1346, 0
        %v1359 = vsel %vm1354, %v1350, 0
        %1361 = vmatprep.subr.bf16.mxu0 0
        %1362 = vmatpush1.bf16.xpose.msra.mxu0 %v1359
        %1363 = vmatprep.subr.bf16.mxu0 0
        %1364 = vmatpush1.bf16.xpose.msra.mxu0 0
        %1365 = vmatprep.subr.bf16.mxu0 0
        %1366 = vmatpush1.bf16.xpose.msra.mxu0 0
        %1367 = vmatprep.subr.bf16.mxu0 0
        %1368 = vmatpush1.bf16.xpose.msra.mxu0 0
        %1369 = vmatprep.subr.bf16.mxu0 0
        %1370 = vmatpush1.bf16.xpose.msra.mxu0 0
        %1371 = vmatprep.subr.bf16.mxu0 0
        %1372 = vmatpush1.bf16.xpose.msra.mxu0 0
        %1373 = vmatprep.subr.bf16.mxu0 0
        %1374 = vmatpush1.bf16.xpose.msra.mxu0 0
        %1375 = vmatprep.subr.bf16.mxu0 0
        %1376 = vmatpush1.bf16.xpose.msra.mxu0 0
        %1377 = vmatprep.subr.bf16.mxu0 0
        %1378 = vmatpush1.bf16.xpose.msra.mxu0 0
        %1379 = vmatprep.subr.bf16.mxu0 0
        %1380 = vmatpush1.bf16.xpose.msra.mxu0 0
        %1381 = vmatprep.subr.bf16.mxu0 0
        %1382 = vmatpush1.bf16.xpose.msra.mxu0 0
        %1383 = vmatprep.subr.bf16.mxu0 0
        %1384 = vmatpush1.bf16.xpose.msra.mxu0 0
        %1385 = vmatprep.subr.bf16.mxu0 0
        %1386 = vmatpush1.bf16.xpose.msra.mxu0 0
        %1387 = vmatprep.subr.bf16.mxu0 0
        %1388 = vmatpush1.bf16.xpose.msra.mxu0 0
        %1389 = vmatprep.subr.bf16.mxu0 0
        %1390 = vmatpush1.bf16.xpose.msra.mxu0 0
        %1391 = vmatprep.subr.bf16.mxu0 0
        %1392 = vmatpush1.bf16.xpose.msra.mxu0 0
        %1393 = vmatprep.mubr.bf16.mxu0 0
        %1394 = vmatmul.mubr.bf16.gmra.mrb[0].mxu0 %v1356
        %v1395 = vpop.f32.mrb[0].mxu0
        %v1396 = vadd.f32 0.0, %v1395
        %v1397 = vpop.f32.mrb[0].mxu0
        %v1398 = vpop.f32.mrb[0].mxu0
        %v1399 = vpop.f32.mrb[0].mxu0
        %1400 = vdwg.mxu0
        %v1402 = vsel %vm1354, %v1347, 0
        %v1405 = vsel %vm1354, %v1351, 0
        %1407 = vmatprep.subr.bf16.mxu0 0
        %1408 = vmatpush1.bf16.xpose.msra.mxu0 %v1405
        %1409 = vmatprep.subr.bf16.mxu0 0
        %1410 = vmatpush1.bf16.xpose.msra.mxu0 0
        %1411 = vmatprep.subr.bf16.mxu0 0
        %1412 = vmatpush1.bf16.xpose.msra.mxu0 0
        %1413 = vmatprep.subr.bf16.mxu0 0
        %1414 = vmatpush1.bf16.xpose.msra.mxu0 0
        %1415 = vmatprep.subr.bf16.mxu0 0
        %1416 = vmatpush1.bf16.xpose.msra.mxu0 0
        %1417 = vmatprep.subr.bf16.mxu0 0
        %1418 = vmatpush1.bf16.xpose.msra.mxu0 0
        %1419 = vmatprep.subr.bf16.mxu0 0
        %1420 = vmatpush1.bf16.xpose.msra.mxu0 0
        %1421 = vmatprep.subr.bf16.mxu0 0
        %1422 = vmatpush1.bf16.xpose.msra.mxu0 0
        %1423 = vmatprep.subr.bf16.mxu0 0
        %1424 = vmatpush1.bf16.xpose.msra.mxu0 0
        %1425 = vmatprep.subr.bf16.mxu0 0
        %1426 = vmatpush1.bf16.xpose.msra.mxu0 0
        %1427 = vmatprep.subr.bf16.mxu0 0
        %1428 = vmatpush1.bf16.xpose.msra.mxu0 0
        %1429 = vmatprep.subr.bf16.mxu0 0
        %1430 = vmatpush1.bf16.xpose.msra.mxu0 0
        %1431 = vmatprep.subr.bf16.mxu0 0
        %1432 = vmatpush1.bf16.xpose.msra.mxu0 0
        %1433 = vmatprep.subr.bf16.mxu0 0
        %1434 = vmatpush1.bf16.xpose.msra.mxu0 0
        %1435 = vmatprep.subr.bf16.mxu0 0
        %1436 = vmatpush1.bf16.xpose.msra.mxu0 0
        %1437 = vmatprep.subr.bf16.mxu0 0
        %1438 = vmatpush1.bf16.xpose.msra.mxu0 0
        %1439 = vmatprep.mubr.bf16.mxu0 0
        %1440 = vmatmul.mubr.bf16.gmra.mrb[0].mxu0 %v1402
        %v1441 = vpop.f32.mrb[0].mxu0
        %v1442 = vadd.f32 0.0, %v1441
        %v1443 = vpop.f32.mrb[0].mxu0
        %v1444 = vpop.f32.mrb[0].mxu0
        %v1445 = vpop.f32.mrb[0].mxu0
        %1446 = vdwg.mxu0
        %v1448 = vsel %vm1354, %v1348, 0
        %v1451 = vsel %vm1354, %v1352, 0
        %1453 = vmatprep.subr.bf16.mxu0 0
        %1454 = vmatpush1.bf16.xpose.msra.mxu0 %v1451
        %1455 = vmatprep.subr.bf16.mxu0 0
        %1456 = vmatpush1.bf16.xpose.msra.mxu0 0
        %1457 = vmatprep.subr.bf16.mxu0 0
        %1458 = vmatpush1.bf16.xpose.msra.mxu0 0
        %1459 = vmatprep.subr.bf16.mxu0 0
        %1460 = vmatpush1.bf16.xpose.msra.mxu0 0
        %1461 = vmatprep.subr.bf16.mxu0 0
        %1462 = vmatpush1.bf16.xpose.msra.mxu0 0
        %1463 = vmatprep.subr.bf16.mxu0 0
        %1464 = vmatpush1.bf16.xpose.msra.mxu0 0
        %1465 = vmatprep.subr.bf16.mxu0 0
        %1466 = vmatpush1.bf16.xpose.msra.mxu0 0
        %1467 = vmatprep.subr.bf16.mxu0 0
        %1468 = vmatpush1.bf16.xpose.msra.mxu0 0
        %1469 = vmatprep.subr.bf16.mxu0 0
        %1470 = vmatpush1.bf16.xpose.msra.mxu0 0
        %1471 = vmatprep.subr.bf16.mxu0 0
        %1472 = vmatpush1.bf16.xpose.msra.mxu0 0
        %1473 = vmatprep.subr.bf16.mxu0 0
        %1474 = vmatpush1.bf16.xpose.msra.mxu0 0
        %1475 = vmatprep.subr.bf16.mxu0 0
        %1476 = vmatpush1.bf16.xpose.msra.mxu0 0
        %1477 = vmatprep.subr.bf16.mxu0 0
        %1478 = vmatpush1.bf16.xpose.msra.mxu0 0
        %1479 = vmatprep.subr.bf16.mxu0 0
        %1480 = vmatpush1.bf16.xpose.msra.mxu0 0
        %1481 = vmatprep.subr.bf16.mxu0 0
        %1482 = vmatpush1.bf16.xpose.msra.mxu0 0
        %1483 = vmatprep.subr.bf16.mxu0 0
        %1484 = vmatpush1.bf16.xpose.msra.mxu0 0
        %1485 = vmatprep.mubr.bf16.mxu0 0
        %1486 = vmatmul.mubr.bf16.gmra.mrb[0].mxu0 %v1448
        %v1487 = vpop.f32.mrb[0].mxu0
        %v1488 = vadd.f32 0.0, %v1487
        %v1489 = vpop.f32.mrb[0].mxu0
        %v1490 = vpop.f32.mrb[0].mxu0
        %v1491 = vpop.f32.mrb[0].mxu0
        %1492 = vdwg.mxu0
        %v1494 = vsel %vm1354, %v1349, 0
        %v1497 = vsel %vm1354, %v1353, 0
        %1499 = vmatprep.subr.bf16.mxu0 0
        %1500 = vmatpush1.bf16.xpose.msra.mxu0 %v1497
        %1501 = vmatprep.subr.bf16.mxu0 0
        %1502 = vmatpush1.bf16.xpose.msra.mxu0 0
        %1503 = vmatprep.subr.bf16.mxu0 0
        %1504 = vmatpush1.bf16.xpose.msra.mxu0 0
        %1505 = vmatprep.subr.bf16.mxu0 0
        %1506 = vmatpush1.bf16.xpose.msra.mxu0 0
        %1507 = vmatprep.subr.bf16.mxu0 0
        %1508 = vmatpush1.bf16.xpose.msra.mxu0 0
        %1509 = vmatprep.subr.bf16.mxu0 0
        %1510 = vmatpush1.bf16.xpose.msra.mxu0 0
        %1511 = vmatprep.subr.bf16.mxu0 0
        %1512 = vmatpush1.bf16.xpose.msra.mxu0 0
        %1513 = vmatprep.subr.bf16.mxu0 0
        %1514 = vmatpush1.bf16.xpose.msra.mxu0 0
        %1515 = vmatprep.subr.bf16.mxu0 0
        %1516 = vmatpush1.bf16.xpose.msra.mxu0 0
        %1517 = vmatprep.subr.bf16.mxu0 0
        %1518 = vmatpush1.bf16.xpose.msra.mxu0 0
        %1519 = vmatprep.subr.bf16.mxu0 0
        %1520 = vmatpush1.bf16.xpose.msra.mxu0 0
        %1521 = vmatprep.subr.bf16.mxu0 0
        %1522 = vmatpush1.bf16.xpose.msra.mxu0 0
        %1523 = vmatprep.subr.bf16.mxu0 0
        %1524 = vmatpush1.bf16.xpose.msra.mxu0 0
        %1525 = vmatprep.subr.bf16.mxu0 0
        %1526 = vmatpush1.bf16.xpose.msra.mxu0 0
        %1527 = vmatprep.subr.bf16.mxu0 0
        %1528 = vmatpush1.bf16.xpose.msra.mxu0 0
        %1529 = vmatprep.subr.bf16.mxu0 0
        %1530 = vmatpush1.bf16.xpose.msra.mxu0 0
        %1531 = vmatprep.mubr.bf16.mxu0 0
        %1532 = vmatmul.mubr.bf16.gmra.mrb[0].mxu0 %v1494
        %v1533 = vpop.f32.mrb[0].mxu0
        %v1534 = vadd.f32 0.0, %v1533
        %v1535 = vpop.f32.mrb[0].mxu0
        %v1536 = vpop.f32.mrb[0].mxu0
        %v1537 = vpop.f32.mrb[0].mxu0
        %1538 = vdwg.mxu0
        %v1539 = vsel %vm1345, 1, 0
        %vm1540 = vcmp.eq.s32.totalorder %v1539, 1
        %v1541 = vsel %vm1540, %v1396, -1e+30
        %v1542 = vsel %vm1540, %v1442, -1e+30
        %v1543 = vsel %vm1540, %v1488, -1e+30
        %v1544 = vsel %vm1540, %v1534, -1e+30
        %v1545 = vsel %vm1354, %v1541, -inf
        %1546 = vmax.xlane.f32.xlu0 %v1545
        %v1547 = vpop.xlane.xlu0 %1546
        %v1548 = vsel %vm1354, %v1542, -inf
        %1549 = vmax.xlane.f32.xlu0 %v1548
        %v1550 = vpop.xlane.xlu0 %1549
        %v1551 = vsel %vm1354, %v1543, -inf
        %1552 = vmax.xlane.f32.xlu0 %v1551
        %v1553 = vpop.xlane.xlu0 %1552
        %v1554 = vsel %vm1354, %v1544, -inf
        %1555 = vmax.xlane.f32.xlu0 %v1554
        %v1556 = vpop.xlane.xlu0 %1555
        %v1557 = vsub.f32 %v1541, %v1547
        %v1558 = vsub.f32 %v1542, %v1550
        %v1559 = vsub.f32 %v1543, %v1553
        %v1560 = vsub.f32 %v1544, %v1556
        %v1561 = vmul.f32 %v1557, 1.442695
        %v1562 = vpow.pop %v1561
        %v1563 = vmul.f32 %v1558, 1.442695
        %v1564 = vpow.pop %v1563
        %v1565 = vmul.f32 %v1559, 1.442695
        %v1566 = vpow.pop %v1565
        %v1567 = vmul.f32 %v1560, 1.442695
        %v1568 = vpow.pop %v1567
        %v1569 = vsel %vm1354, %v1562, 0.0
        %1570 = vadd.xlane.f32.xlu0 %v1569
        %v1571 = vpop.xlane.xlu0 %1570
        %v1572 = vsel %vm1354, %v1564, 0.0
        %1573 = vadd.xlane.f32.xlu0 %v1572
        %v1574 = vpop.xlane.xlu0 %1573
        %v1575 = vsel %vm1354, %v1566, 0.0
        %1576 = vadd.xlane.f32.xlu0 %v1575
        %v1577 = vpop.xlane.xlu0 %1576
        %v1578 = vsel %vm1354, %v1568, 0.0
        %1579 = vadd.xlane.f32.xlu0 %v1578
        %v1580 = vpop.xlane.xlu0 %1579
        %v1581 = vrcp.pop %v1571
        %v1582 = vrcp.pop %v1574
        %v1583 = vrcp.pop %v1577
        %v1584 = vrcp.pop %v1580
        %v1585 = vmul.f32 %v1562, %v1581
        %v1586 = vmul.f32 %v1564, %v1582
        %v1587 = vmul.f32 %v1566, %v1583
        %v1588 = vmul.f32 %v1568, %v1584
        %v1589 = vpack.c.bf16 %v1585, %v1585
        %v1590 = vpack.c.bf16 %v1586, %v1586
        %v1591 = vpack.c.bf16 %v1587, %v1587
        %v1592 = vpack.c.bf16 %v1588, %v1588
        %v1593 = vpack.c.bf16 %v1176, %v1176
        %v1594 = vpack.c.bf16 %v1228, %v1228
        %v1595 = vpack.c.bf16 %v1280, %v1280
        %v1596 = vpack.c.bf16 %v1332, %v1332
        %v1598 = vsel %vm1354, %v1589, 0
        %vm1600 = vcmask 1043456
        %v1602 = vsel %vm1600, %v1593, 0
        %1604 = vmatprep.subr.bf16.mxu0 0
        %1605 = vmatpush1.bf16.msra.mxu0 %v1602
        %1606 = vmatprep.subr.bf16.mxu0 0
        %1607 = vmatpush1.bf16.msra.mxu0 0
        %1608 = vmatprep.subr.bf16.mxu0 0
        %1609 = vmatpush1.bf16.msra.mxu0 0
        %1610 = vmatprep.subr.bf16.mxu0 0
        %1611 = vmatpush1.bf16.msra.mxu0 0
        %1612 = vmatprep.subr.bf16.mxu0 0
        %1613 = vmatpush1.bf16.msra.mxu0 0
        %1614 = vmatprep.subr.bf16.mxu0 0
        %1615 = vmatpush1.bf16.msra.mxu0 0
        %1616 = vmatprep.subr.bf16.mxu0 0
        %1617 = vmatpush1.bf16.msra.mxu0 0
        %1618 = vmatprep.subr.bf16.mxu0 0
        %1619 = vmatpush1.bf16.msra.mxu0 0
        %1620 = vmatprep.subr.bf16.mxu0 0
        %1621 = vmatpush1.bf16.msra.mxu0 0
        %1622 = vmatprep.subr.bf16.mxu0 0
        %1623 = vmatpush1.bf16.msra.mxu0 0
        %1624 = vmatprep.subr.bf16.mxu0 0
        %1625 = vmatpush1.bf16.msra.mxu0 0
        %1626 = vmatprep.subr.bf16.mxu0 0
        %1627 = vmatpush1.bf16.msra.mxu0 0
        %1628 = vmatprep.subr.bf16.mxu0 0
        %1629 = vmatpush1.bf16.msra.mxu0 0
        %1630 = vmatprep.subr.bf16.mxu0 0
        %1631 = vmatpush1.bf16.msra.mxu0 0
        %1632 = vmatprep.subr.bf16.mxu0 0
        %1633 = vmatpush1.bf16.msra.mxu0 0
        %1634 = vmatprep.subr.bf16.mxu0 0
        %1635 = vmatpush1.bf16.msra.mxu0 0
        %1636 = vmatprep.mubr.bf16.mxu0 0
        %1637 = vmatmul.mubr.bf16.gmra.mrb[0].mxu0 %v1598
        %v1638 = vpop.f32.mrb[0].mxu0
        %v1639 = vadd.f32 0.0, %v1638
        %v1640 = vpop.f32.mrb[0].mxu0
        %v1641 = vpop.f32.mrb[0].mxu0
        %v1642 = vpop.f32.mrb[0].mxu0
        %1643 = vdwg.mxu0
        %v1645 = vsel %vm1354, %v1590, 0
        %v1648 = vsel %vm1600, %v1594, 0
        %1650 = vmatprep.subr.bf16.mxu0 0
        %1651 = vmatpush1.bf16.msra.mxu0 %v1648
        %1652 = vmatprep.subr.bf16.mxu0 0
        %1653 = vmatpush1.bf16.msra.mxu0 0
        %1654 = vmatprep.subr.bf16.mxu0 0
        %1655 = vmatpush1.bf16.msra.mxu0 0
        %1656 = vmatprep.subr.bf16.mxu0 0
        %1657 = vmatpush1.bf16.msra.mxu0 0
        %1658 = vmatprep.subr.bf16.mxu0 0
        %1659 = vmatpush1.bf16.msra.mxu0 0
        %1660 = vmatprep.subr.bf16.mxu0 0
        %1661 = vmatpush1.bf16.msra.mxu0 0
        %1662 = vmatprep.subr.bf16.mxu0 0
        %1663 = vmatpush1.bf16.msra.mxu0 0
        %1664 = vmatprep.subr.bf16.mxu0 0
        %1665 = vmatpush1.bf16.msra.mxu0 0
        %1666 = vmatprep.subr.bf16.mxu0 0
        %1667 = vmatpush1.bf16.msra.mxu0 0
        %1668 = vmatprep.subr.bf16.mxu0 0
        %1669 = vmatpush1.bf16.msra.mxu0 0
        %1670 = vmatprep.subr.bf16.mxu0 0
        %1671 = vmatpush1.bf16.msra.mxu0 0
        %1672 = vmatprep.subr.bf16.mxu0 0
        %1673 = vmatpush1.bf16.msra.mxu0 0
        %1674 = vmatprep.subr.bf16.mxu0 0
        %1675 = vmatpush1.bf16.msra.mxu0 0
        %1676 = vmatprep.subr.bf16.mxu0 0
        %1677 = vmatpush1.bf16.msra.mxu0 0
        %1678 = vmatprep.subr.bf16.mxu0 0
        %1679 = vmatpush1.bf16.msra.mxu0 0
        %1680 = vmatprep.subr.bf16.mxu0 0
        %1681 = vmatpush1.bf16.msra.mxu0 0
        %1682 = vmatprep.mubr.bf16.mxu0 0
        %1683 = vmatmul.mubr.bf16.gmra.mrb[0].mxu0 %v1645
        %v1684 = vpop.f32.mrb[0].mxu0
        %v1685 = vadd.f32 0.0, %v1684
        %v1686 = vpop.f32.mrb[0].mxu0
        %v1687 = vpop.f32.mrb[0].mxu0
        %v1688 = vpop.f32.mrb[0].mxu0
        %1689 = vdwg.mxu0
        %v1691 = vsel %vm1354, %v1591, 0
        %v1694 = vsel %vm1600, %v1595, 0
        %1696 = vmatprep.subr.bf16.mxu0 0
        %1697 = vmatpush1.bf16.msra.mxu0 %v1694
        %1698 = vmatprep.subr.bf16.mxu0 0
        %1699 = vmatpush1.bf16.msra.mxu0 0
        %1700 = vmatprep.subr.bf16.mxu0 0
        %1701 = vmatpush1.bf16.msra.mxu0 0
        %1702 = vmatprep.subr.bf16.mxu0 0
        %1703 = vmatpush1.bf16.msra.mxu0 0
        %1704 = vmatprep.subr.bf16.mxu0 0
        %1705 = vmatpush1.bf16.msra.mxu0 0
        %1706 = vmatprep.subr.bf16.mxu0 0
        %1707 = vmatpush1.bf16.msra.mxu0 0
        %1708 = vmatprep.subr.bf16.mxu0 0
        %1709 = vmatpush1.bf16.msra.mxu0 0
        %1710 = vmatprep.subr.bf16.mxu0 0
        %1711 = vmatpush1.bf16.msra.mxu0 0
        %1712 = vmatprep.subr.bf16.mxu0 0
        %1713 = vmatpush1.bf16.msra.mxu0 0
        %1714 = vmatprep.subr.bf16.mxu0 0
        %1715 = vmatpush1.bf16.msra.mxu0 0
        %1716 = vmatprep.subr.bf16.mxu0 0
        %1717 = vmatpush1.bf16.msra.mxu0 0
        %1718 = vmatprep.subr.bf16.mxu0 0
        %1719 = vmatpush1.bf16.msra.mxu0 0
        %1720 = vmatprep.subr.bf16.mxu0 0
        %1721 = vmatpush1.bf16.msra.mxu0 0
        %1722 = vmatprep.subr.bf16.mxu0 0
        %1723 = vmatpush1.bf16.msra.mxu0 0
        %1724 = vmatprep.subr.bf16.mxu0 0
        %1725 = vmatpush1.bf16.msra.mxu0 0
        %1726 = vmatprep.subr.bf16.mxu0 0
        %1727 = vmatpush1.bf16.msra.mxu0 0
        %1728 = vmatprep.mubr.bf16.mxu0 0
        %1729 = vmatmul.mubr.bf16.gmra.mrb[0].mxu0 %v1691
        %v1730 = vpop.f32.mrb[0].mxu0
        %v1731 = vadd.f32 0.0, %v1730
        %v1732 = vpop.f32.mrb[0].mxu0
        %v1733 = vpop.f32.mrb[0].mxu0
        %v1734 = vpop.f32.mrb[0].mxu0
        %1735 = vdwg.mxu0
        %v1737 = vsel %vm1354, %v1592, 0
        %v1740 = vsel %vm1600, %v1596, 0
        %1742 = vmatprep.subr.bf16.mxu0 0
        %1743 = vmatpush1.bf16.msra.mxu0 %v1740
        %1744 = vmatprep.subr.bf16.mxu0 0
        %1745 = vmatpush1.bf16.msra.mxu0 0
        %1746 = vmatprep.subr.bf16.mxu0 0
        %1747 = vmatpush1.bf16.msra.mxu0 0
        %1748 = vmatprep.subr.bf16.mxu0 0
        %1749 = vmatpush1.bf16.msra.mxu0 0
        %1750 = vmatprep.subr.bf16.mxu0 0
        %1751 = vmatpush1.bf16.msra.mxu0 0
        %1752 = vmatprep.subr.bf16.mxu0 0
        %1753 = vmatpush1.bf16.msra.mxu0 0
        %1754 = vmatprep.subr.bf16.mxu0 0
        %1755 = vmatpush1.bf16.msra.mxu0 0
        %1756 = vmatprep.subr.bf16.mxu0 0
        %1757 = vmatpush1.bf16.msra.mxu0 0
        %1758 = vmatprep.subr.bf16.mxu0 0
        %1759 = vmatpush1.bf16.msra.mxu0 0
        %1760 = vmatprep.subr.bf16.mxu0 0
        %1761 = vmatpush1.bf16.msra.mxu0 0
        %1762 = vmatprep.subr.bf16.mxu0 0
        %1763 = vmatpush1.bf16.msra.mxu0 0
        %1764 = vmatprep.subr.bf16.mxu0 0
        %1765 = vmatpush1.bf16.msra.mxu0 0
        %1766 = vmatprep.subr.bf16.mxu0 0
        %1767 = vmatpush1.bf16.msra.mxu0 0
        %1768 = vmatprep.subr.bf16.mxu0 0
        %1769 = vmatpush1.bf16.msra.mxu0 0
        %1770 = vmatprep.subr.bf16.mxu0 0
        %1771 = vmatpush1.bf16.msra.mxu0 0
        %1772 = vmatprep.subr.bf16.mxu0 0
        %1773 = vmatpush1.bf16.msra.mxu0 0
        %1774 = vmatprep.mubr.bf16.mxu0 0
        %1775 = vmatmul.mubr.bf16.gmra.mrb[0].mxu0 %v1737
        %v1776 = vpop.f32.mrb[0].mxu0
        %v1777 = vadd.f32 0.0, %v1776
        %v1778 = vpop.f32.mrb[0].mxu0
        %v1779 = vpop.f32.mrb[0].mxu0
        %v1780 = vpop.f32.mrb[0].mxu0
        %1781 = vdwg.mxu0
        %v1782 = vpack.c.bf16 %v1639, %v1639
        %v1783 = vpack.c.bf16 %v1685, %v1685
        %v1784 = vpack.c.bf16 %v1731, %v1731
        %v1785 = vpack.c.bf16 %v1777, %v1777
        %v1786 = vld [vmem:[%s9] sm:$0xf]
        %v1787 = vld [vmem:[%s9 + $0x4] sm:$0xf]
        %v1788 = vld [vmem:[%s9 + $0x8] sm:$0xf]
        %v1789 = vld [vmem:[%s9 + $0xc] sm:$0xf]
        %v1791 = vsel %vm1354, %v1782, 0
        %v1794 = vsel %vm1600, %v1786, 0
        %1796 = vmatprep.subr.bf16.mxu0 0
        %1797 = vmatpush1.bf16.msra.mxu0 %v1794
        %1798 = vmatprep.subr.bf16.mxu0 0
        %1799 = vmatpush1.bf16.msra.mxu0 0
        %1800 = vmatprep.subr.bf16.mxu0 0
        %1801 = vmatpush1.bf16.msra.mxu0 0
        %1802 = vmatprep.subr.bf16.mxu0 0
        %1803 = vmatpush1.bf16.msra.mxu0 0
        %1804 = vmatprep.subr.bf16.mxu0 0
        %1805 = vmatpush1.bf16.msra.mxu0 0
        %1806 = vmatprep.subr.bf16.mxu0 0
        %1807 = vmatpush1.bf16.msra.mxu0 0
        %1808 = vmatprep.subr.bf16.mxu0 0
        %1809 = vmatpush1.bf16.msra.mxu0 0
        %1810 = vmatprep.subr.bf16.mxu0 0
        %1811 = vmatpush1.bf16.msra.mxu0 0
        %1812 = vmatprep.subr.bf16.mxu0 0
        %1813 = vmatpush1.bf16.msra.mxu0 0
        %1814 = vmatprep.subr.bf16.mxu0 0
        %1815 = vmatpush1.bf16.msra.mxu0 0
        %1816 = vmatprep.subr.bf16.mxu0 0
        %1817 = vmatpush1.bf16.msra.mxu0 0
        %1818 = vmatprep.subr.bf16.mxu0 0
        %1819 = vmatpush1.bf16.msra.mxu0 0
        %1820 = vmatprep.subr.bf16.mxu0 0
        %1821 = vmatpush1.bf16.msra.mxu0 0
        %1822 = vmatprep.subr.bf16.mxu0 0
        %1823 = vmatpush1.bf16.msra.mxu0 0
        %1824 = vmatprep.subr.bf16.mxu0 0
        %1825 = vmatpush1.bf16.msra.mxu0 0
        %1826 = vmatprep.subr.bf16.mxu0 0
        %1827 = vmatpush1.bf16.msra.mxu0 0
        %1828 = vmatprep.mubr.bf16.mxu0 0
        %1829 = vmatmul.mubr.bf16.gmra.mrb[0].mxu0 %v1791
        %v1830 = vpop.f32.mrb[0].mxu0
        %v1831 = vadd.f32 0.0, %v1830
        %v1832 = vpop.f32.mrb[0].mxu0
        %v1833 = vpop.f32.mrb[0].mxu0
        %v1834 = vpop.f32.mrb[0].mxu0
        %1835 = vdwg.mxu0
        %v1837 = vsel %vm1354, %v1783, 0
        %v1840 = vsel %vm1600, %v1787, 0
        %1842 = vmatprep.subr.bf16.mxu0 0
        %1843 = vmatpush1.bf16.msra.mxu0 %v1840
        %1844 = vmatprep.subr.bf16.mxu0 0
        %1845 = vmatpush1.bf16.msra.mxu0 0
        %1846 = vmatprep.subr.bf16.mxu0 0
        %1847 = vmatpush1.bf16.msra.mxu0 0
        %1848 = vmatprep.subr.bf16.mxu0 0
        %1849 = vmatpush1.bf16.msra.mxu0 0
        %1850 = vmatprep.subr.bf16.mxu0 0
        %1851 = vmatpush1.bf16.msra.mxu0 0
        %1852 = vmatprep.subr.bf16.mxu0 0
        %1853 = vmatpush1.bf16.msra.mxu0 0
        %1854 = vmatprep.subr.bf16.mxu0 0
        %1855 = vmatpush1.bf16.msra.mxu0 0
        %1856 = vmatprep.subr.bf16.mxu0 0
        %1857 = vmatpush1.bf16.msra.mxu0 0
        %1858 = vmatprep.subr.bf16.mxu0 0
        %1859 = vmatpush1.bf16.msra.mxu0 0
        %1860 = vmatprep.subr.bf16.mxu0 0
        %1861 = vmatpush1.bf16.msra.mxu0 0
        %1862 = vmatprep.subr.bf16.mxu0 0
        %1863 = vmatpush1.bf16.msra.mxu0 0
        %1864 = vmatprep.subr.bf16.mxu0 0
        %1865 = vmatpush1.bf16.msra.mxu0 0
        %1866 = vmatprep.subr.bf16.mxu0 0
        %1867 = vmatpush1.bf16.msra.mxu0 0
        %1868 = vmatprep.subr.bf16.mxu0 0
        %1869 = vmatpush1.bf16.msra.mxu0 0
        %1870 = vmatprep.subr.bf16.mxu0 0
        %1871 = vmatpush1.bf16.msra.mxu0 0
        %1872 = vmatprep.subr.bf16.mxu0 0
        %1873 = vmatpush1.bf16.msra.mxu0 0
        %1874 = vmatprep.mubr.bf16.mxu0 0
        %1875 = vmatmul.mubr.bf16.gmra.mrb[0].mxu0 %v1837
        %v1876 = vpop.f32.mrb[0].mxu0
        %v1877 = vadd.f32 0.0, %v1876
        %v1878 = vpop.f32.mrb[0].mxu0
        %v1879 = vpop.f32.mrb[0].mxu0
        %v1880 = vpop.f32.mrb[0].mxu0
        %1881 = vdwg.mxu0
        %v1883 = vsel %vm1354, %v1784, 0
        %v1886 = vsel %vm1600, %v1788, 0
        %1888 = vmatprep.subr.bf16.mxu0 0
        %1889 = vmatpush1.bf16.msra.mxu0 %v1886
        %1890 = vmatprep.subr.bf16.mxu0 0
        %1891 = vmatpush1.bf16.msra.mxu0 0
        %1892 = vmatprep.subr.bf16.mxu0 0
        %1893 = vmatpush1.bf16.msra.mxu0 0
        %1894 = vmatprep.subr.bf16.mxu0 0
        %1895 = vmatpush1.bf16.msra.mxu0 0
        %1896 = vmatprep.subr.bf16.mxu0 0
        %1897 = vmatpush1.bf16.msra.mxu0 0
        %1898 = vmatprep.subr.bf16.mxu0 0
        %1899 = vmatpush1.bf16.msra.mxu0 0
        %1900 = vmatprep.subr.bf16.mxu0 0
        %1901 = vmatpush1.bf16.msra.mxu0 0
        %1902 = vmatprep.subr.bf16.mxu0 0
        %1903 = vmatpush1.bf16.msra.mxu0 0
        %1904 = vmatprep.subr.bf16.mxu0 0
        %1905 = vmatpush1.bf16.msra.mxu0 0
        %1906 = vmatprep.subr.bf16.mxu0 0
        %1907 = vmatpush1.bf16.msra.mxu0 0
        %1908 = vmatprep.subr.bf16.mxu0 0
        %1909 = vmatpush1.bf16.msra.mxu0 0
        %1910 = vmatprep.subr.bf16.mxu0 0
        %1911 = vmatpush1.bf16.msra.mxu0 0
        %1912 = vmatprep.subr.bf16.mxu0 0
        %1913 = vmatpush1.bf16.msra.mxu0 0
        %1914 = vmatprep.subr.bf16.mxu0 0
        %1915 = vmatpush1.bf16.msra.mxu0 0
        %1916 = vmatprep.subr.bf16.mxu0 0
        %1917 = vmatpush1.bf16.msra.mxu0 0
        %1918 = vmatprep.subr.bf16.mxu0 0
        %1919 = vmatpush1.bf16.msra.mxu0 0
        %1920 = vmatprep.mubr.bf16.mxu0 0
        %1921 = vmatmul.mubr.bf16.gmra.mrb[0].mxu0 %v1883
        %v1922 = vpop.f32.mrb[0].mxu0
        %v1923 = vadd.f32 0.0, %v1922
        %v1924 = vpop.f32.mrb[0].mxu0
        %v1925 = vpop.f32.mrb[0].mxu0
        %v1926 = vpop.f32.mrb[0].mxu0
        %1927 = vdwg.mxu0
        %v1929 = vsel %vm1354, %v1785, 0
        %v1932 = vsel %vm1600, %v1789, 0
        %1934 = vmatprep.subr.bf16.mxu0 0
        %1935 = vmatpush1.bf16.msra.mxu0 %v1932
        %1936 = vmatprep.subr.bf16.mxu0 0
        %1937 = vmatpush1.bf16.msra.mxu0 0
        %1938 = vmatprep.subr.bf16.mxu0 0
        %1939 = vmatpush1.bf16.msra.mxu0 0
        %1940 = vmatprep.subr.bf16.mxu0 0
        %1941 = vmatpush1.bf16.msra.mxu0 0
        %1942 = vmatprep.subr.bf16.mxu0 0
        %1943 = vmatpush1.bf16.msra.mxu0 0
        %1944 = vmatprep.subr.bf16.mxu0 0
        %1945 = vmatpush1.bf16.msra.mxu0 0
        %1946 = vmatprep.subr.bf16.mxu0 0
        %1947 = vmatpush1.bf16.msra.mxu0 0
        %1948 = vmatprep.subr.bf16.mxu0 0
        %1949 = vmatpush1.bf16.msra.mxu0 0
        %1950 = vmatprep.subr.bf16.mxu0 0
        %1951 = vmatpush1.bf16.msra.mxu0 0
        %1952 = vmatprep.subr.bf16.mxu0 0
        %1953 = vmatpush1.bf16.msra.mxu0 0
        %1954 = vmatprep.subr.bf16.mxu0 0
        %1955 = vmatpush1.bf16.msra.mxu0 0
        %1956 = vmatprep.subr.bf16.mxu0 0
        %1957 = vmatpush1.bf16.msra.mxu0 0
        %1958 = vmatprep.subr.bf16.mxu0 0
        %1959 = vmatpush1.bf16.msra.mxu0 0
        %1960 = vmatprep.subr.bf16.mxu0 0
        %1961 = vmatpush1.bf16.msra.mxu0 0
        %1962 = vmatprep.subr.bf16.mxu0 0
        %1963 = vmatpush1.bf16.msra.mxu0 0
        %1964 = vmatprep.subr.bf16.mxu0 0
        %1965 = vmatpush1.bf16.msra.mxu0 0
        %1966 = vmatprep.mubr.bf16.mxu0 0
        %1967 = vmatmul.mubr.bf16.gmra.mrb[0].mxu0 %v1929
        %v1968 = vpop.f32.mrb[0].mxu0
        %v1969 = vadd.f32 0.0, %v1968
        %v1970 = vpop.f32.mrb[0].mxu0
        %v1971 = vpop.f32.mrb[0].mxu0
        %v1972 = vpop.f32.mrb[0].mxu0
        %1973 = vdwg.mxu0
        %v1974 = vsel %vm548, %v1831, 0.0
        %v1975 = vsel %vm548, %v1877, 0.0
        %v1976 = vadd.f32 %v1974, %v1975
        %v1977 = vsel %vm548, %v1923, 0.0
        %v1978 = vadd.f32 %v1976, %v1977
        %v1979 = vsel %vm548, %v1969, 0.0
        %v1980 = vadd.f32 %v1978, %v1979
        %v1981 = vld [vmem:[%s10] sm:$0x1]
        %v1983 = vlaneseq
        %v1984 = vshrl.u32 %v1983, 7
        %v1985 = vsub.s32 0, %v1984
        %v1986 = vrot.slane %v1981, %v1985
        %v1988 = vadd.f32 %v1980, %v1986
        %v1989 = vadd.f32 %v545, %v1988
        %v1990 = vld [vmem:[%s11] sm:$0x1]
        %v1991 = vld [vmem:[%s12] sm:$0x1]
        %v1992 = vsel %vm548, %v1989, 0.0
        %1993 = vadd.xlane.f32.xlu0 %v1992
        %v1994 = vpop.xlane.xlu0 %1993
        %v1995 = vmul.f32 %v1994, %v552
        %v1996 = vsub.f32 %v1989, %v1995
        %v1997 = vmul.f32 %v1996, %v1996
        %v1998 = vsel %vm548, %v1997, 0.0
        %1999 = vadd.xlane.f32.xlu0 %v1998
        %v2000 = vpop.xlane.xlu0 %1999
        %v2001 = vmul.f32 %v2000, %v552
        %v2002 = vadd.f32 %v2001, 1e-05
        %v2003 = vrsqrt.pop %v2002
        %v2004 = vmul.f32 %v1996, %v2003
        %v2006 = vlaneseq
        %v2007 = vshrl.u32 %v2006, 7
        %v2008 = vsub.s32 0, %v2007
        %v2009 = vrot.slane %v1990, %v2008
        %v2011 = vmul.f32 %v2004, %v2009
        %v2013 = vlaneseq
        %v2014 = vshrl.u32 %v2013, 7
        %v2015 = vsub.s32 0, %v2014
        %v2016 = vrot.slane %v1991, %v2015
        %v2018 = vadd.f32 %v2011, %v2016
        %v2019 = vpack.c.bf16 %v2018, %v2018
        %v2020 = vld [vmem:[%s13] sm:$0xf]
        %v2021 = vld [vmem:[%s13 + $0x4] sm:$0xf]
        %v2022 = vld [vmem:[%s13 + $0x8] sm:$0xf]
        %v2023 = vld [vmem:[%s13 + $0xc] sm:$0xf]
        %v2024 = vld [vmem:[%s14] sm:$0x1]
        %v2026 = vlaneseq
        %v2027 = vshrl.u32 %v2026, 7
        %v2028 = vsub.s32 0, %v2027
        %v2029 = vrot.slane %v2024, %v2028
        %v2035 = vunpack.c.l.b16 %v2020
        %v2036 = vunpack.c.l.b16 %v2021
        %v2037 = vunpack.c.l.b16 %v2022
        %v2038 = vunpack.c.l.b16 %v2023
        %v2039 = vpack.c.b16 %v2036, %v2035
        %v2040 = vpack.c.b16 %v2038, %v2037
        %v2044 = vsel %vm548, %v2019, 0
        %2046 = vmatprep.subr.bf16.mxu0 0
        %2047 = vmatpush1.bf16.msra.mxu0 %v2039
        %2048 = vmatprep.subr.bf16.mxu0 0
        %2049 = vmatpush1.bf16.msra.mxu0 %v2040
        %2050 = vmatprep.subr.bf16.mxu0 0
        %2051 = vmatpush1.bf16.msra.mxu0 0
        %2052 = vmatprep.subr.bf16.mxu0 0
        %2053 = vmatpush1.bf16.msra.mxu0 0
        %2054 = vmatprep.subr.bf16.mxu0 0
        %2055 = vmatpush1.bf16.msra.mxu0 0
        %2056 = vmatprep.subr.bf16.mxu0 0
        %2057 = vmatpush1.bf16.msra.mxu0 0
        %2058 = vmatprep.subr.bf16.mxu0 0
        %2059 = vmatpush1.bf16.msra.mxu0 0
        %2060 = vmatprep.subr.bf16.mxu0 0
        %2061 = vmatpush1.bf16.msra.mxu0 0
        %2062 = vmatprep.subr.bf16.mxu0 0
        %2063 = vmatpush1.bf16.msra.mxu0 0
        %2064 = vmatprep.subr.bf16.mxu0 0
        %2065 = vmatpush1.bf16.msra.mxu0 0
        %2066 = vmatprep.subr.bf16.mxu0 0
        %2067 = vmatpush1.bf16.msra.mxu0 0
        %2068 = vmatprep.subr.bf16.mxu0 0
        %2069 = vmatpush1.bf16.msra.mxu0 0
        %2070 = vmatprep.subr.bf16.mxu0 0
        %2071 = vmatpush1.bf16.msra.mxu0 0
        %2072 = vmatprep.subr.bf16.mxu0 0
        %2073 = vmatpush1.bf16.msra.mxu0 0
        %2074 = vmatprep.subr.bf16.mxu0 0
        %2075 = vmatpush1.bf16.msra.mxu0 0
        %2076 = vmatprep.subr.bf16.mxu0 0
        %2077 = vmatpush1.bf16.msra.mxu0 0
        %2078 = vmatprep.mubr.bf16.mxu0 0
        %2079 = vmatmul.mubr.bf16.gmra.mrb[0].mxu0 %v2044
        %v2080 = vpop.f32.mrb[0].mxu0
        %v2081 = vadd.f32 %v2029, %v2080
        %v2082 = vpop.f32.mrb[0].mxu0
        %v2083 = vpop.f32.mrb[0].mxu0
        %v2084 = vpop.f32.mrb[0].mxu0
        %2085 = vdwg.mxu0
        %v2086 = vmul.f32 %v2081, 0.5
        %v2087 = vmul.f32 %v2081, 0.70710677
        %v2088 = verf.f32.pop %v2087
        %v2089 = vadd.f32 %v2088, 1.0
        %v2090 = vmul.f32 %v2086, %v2089
        %v2091 = vpack.c.bf16 %v2090, %v2090
        %v2092 = vld [vmem:[%s15] sm:$0xf]
        %v2093 = vld [vmem:[%s15 + $0x4] sm:$0xf]
        %v2094 = vld [vmem:[%s15 + $0x8] sm:$0xf]
        %v2095 = vld [vmem:[%s15 + $0xc] sm:$0xf]
        %v2096 = vld [vmem:[%s15 + $0x10] sm:$0xf]
        %v2097 = vld [vmem:[%s15 + $0x14] sm:$0xf]
        %v2098 = vld [vmem:[%s15 + $0x18] sm:$0xf]
        %v2099 = vld [vmem:[%s15 + $0x1c] sm:$0xf]
        %v2100 = vld [vmem:[%s15 + $0x20] sm:$0xf]
        %v2101 = vld [vmem:[%s15 + $0x24] sm:$0xf]
        %v2102 = vld [vmem:[%s15 + $0x28] sm:$0xf]
        %v2103 = vld [vmem:[%s15 + $0x2c] sm:$0xf]
        %v2104 = vld [vmem:[%s15 + $0x30] sm:$0xf]
        %v2105 = vld [vmem:[%s15 + $0x34] sm:$0xf]
        %v2106 = vld [vmem:[%s15 + $0x38] sm:$0xf]
        %v2107 = vld [vmem:[%s15 + $0x3c] sm:$0xf]
        %v2108 = vld [vmem:[%s16] sm:$0x1]
        %v2110 = vlaneseq
        %v2111 = vshrl.u32 %v2110, 7
        %v2112 = vsub.s32 0, %v2111
        %v2113 = vrot.slane %v2108, %v2112
        %v2131 = vunpack.c.l.b16 %v2092
        %v2132 = vunpack.c.l.b16 %v2093
        %v2133 = vunpack.c.l.b16 %v2094
        %v2134 = vunpack.c.l.b16 %v2095
        %v2135 = vunpack.c.l.b16 %v2096
        %v2136 = vunpack.c.l.b16 %v2097
        %v2137 = vunpack.c.l.b16 %v2098
        %v2138 = vunpack.c.l.b16 %v2099
        %v2139 = vunpack.c.l.b16 %v2100
        %v2140 = vunpack.c.l.b16 %v2101
        %v2141 = vunpack.c.l.b16 %v2102
        %v2142 = vunpack.c.l.b16 %v2103
        %v2143 = vunpack.c.l.b16 %v2104
        %v2144 = vunpack.c.l.b16 %v2105
        %v2145 = vunpack.c.l.b16 %v2106
        %v2146 = vunpack.c.l.b16 %v2107
        %v2147 = vpack.c.b16 %v2132, %v2131
        %v2148 = vpack.c.b16 %v2134, %v2133
        %v2149 = vpack.c.b16 %v2136, %v2135
        %v2150 = vpack.c.b16 %v2138, %v2137
        %v2151 = vpack.c.b16 %v2140, %v2139
        %v2152 = vpack.c.b16 %v2142, %v2141
        %v2153 = vpack.c.b16 %v2144, %v2143
        %v2154 = vpack.c.b16 %v2146, %v2145
        %2163 = vmatprep.subr.bf16.mxu0 0
        %2164 = vmatpush1.bf16.msra.mxu0 %v2147
        %2165 = vmatprep.subr.bf16.mxu0 0
        %2166 = vmatpush1.bf16.msra.mxu0 %v2148
        %2167 = vmatprep.subr.bf16.mxu0 0
        %2168 = vmatpush1.bf16.msra.mxu0 %v2149
        %2169 = vmatprep.subr.bf16.mxu0 0
        %2170 = vmatpush1.bf16.msra.mxu0 %v2150
        %2171 = vmatprep.subr.bf16.mxu0 0
        %2172 = vmatpush1.bf16.msra.mxu0 %v2151
        %2173 = vmatprep.subr.bf16.mxu0 0
        %2174 = vmatpush1.bf16.msra.mxu0 %v2152
        %2175 = vmatprep.subr.bf16.mxu0 0
        %2176 = vmatpush1.bf16.msra.mxu0 %v2153
        %2177 = vmatprep.subr.bf16.mxu0 0
        %2178 = vmatpush1.bf16.msra.mxu0 %v2154
        %2179 = vmatprep.subr.bf16.mxu0 0
        %2180 = vmatpush1.bf16.msra.mxu0 0
        %2181 = vmatprep.subr.bf16.mxu0 0
        %2182 = vmatpush1.bf16.msra.mxu0 0
        %2183 = vmatprep.subr.bf16.mxu0 0
        %2184 = vmatpush1.bf16.msra.mxu0 0
        %2185 = vmatprep.subr.bf16.mxu0 0
        %2186 = vmatpush1.bf16.msra.mxu0 0
        %2187 = vmatprep.subr.bf16.mxu0 0
        %2188 = vmatpush1.bf16.msra.mxu0 0
        %2189 = vmatprep.subr.bf16.mxu0 0
        %2190 = vmatpush1.bf16.msra.mxu0 0
        %2191 = vmatprep.subr.bf16.mxu0 0
        %2192 = vmatpush1.bf16.msra.mxu0 0
        %2193 = vmatprep.subr.bf16.mxu0 0
        %2194 = vmatpush1.bf16.msra.mxu0 0
        %2195 = vmatprep.mubr.bf16.mxu0 0
        %2196 = vmatmul.mubr.bf16.gmra.mrb[0].mxu0 %v2091
        %v2197 = vpop.f32.mrb[0].mxu0
        %v2198 = vadd.f32 %v2113, %v2197
        %v2199 = vpop.f32.mrb[0].mxu0
        %v2200 = vpop.f32.mrb[0].mxu0
        %v2201 = vpop.f32.mrb[0].mxu0
        %2202 = vdwg.mxu0
        %v2203 = vadd.f32 %v1989, %v2198
        %2204 = vst.msk [vmem:[%s539] sm:$0xff] %vm548, %v2203
        %s2205 = sand.u32 %s401, 1
        %s2206 = scalar_lea.sflag [#allocation3], %s2205
        %s2207 = sand.u32 %s401, 1
        %s2208 = smul.addr %s2207, 8
        %s2209 = scalar_lea.vmem [#allocation2], %s2208
        // Predicated region
        $region89: #{tpu_custom_call.1} parent=87 // pred_check
          %p2210 = pneg %p411
        $region90: #{tpu_custom_call.1} parent=87 // pred_check_branch
          %2212 = sbr.rel (%p2210) target = $region92
        $region91: #{tpu_custom_call.1} parent=87 // pred_region
          %s2214 = ssub.s32 128, 128
          %2215 = vsyncadd %s2206, %s2214
          %s2216 = smul.addr %s31, 128
          %s2217 = scalar_lea.hbm %s17, %s2216
          %s2219 = sshll.u32 %s2209, 4
          %s2220 = int_to_ptr.vmem [resolvable:$true] %s2219
          %2222 = dma.vmem_to_hbm [thread:$0]  %s2220, 128, %s2217, %s2206
        $region92: #{tpu_custom_call.1} parent=87 // pred_fallthru
          _
      $region88: #{tpu_custom_call.1} parent=5 // pred_fallthru
        _
      %p2223 = scmp.le.s32.totalorder 2, %s26
      // Predicated region
      $region93: #{tpu_custom_call.1} parent=5 // pred_check
        %p2224 = pneg %p2223
      $region94: #{tpu_custom_call.1} parent=5 // pred_check_branch
        %2226 = sbr.rel (%p2224) target = $region96
      $region95: #{tpu_custom_call.1} parent=5 // pred_region
        %s2227 = ssub.s32 %s26, 2
        // Predicated region
        $region97: #{tpu_custom_call.1} parent=95 // pred_check
          %p2228 = pneg %p417
        $region98: #{tpu_custom_call.1} parent=95 // pred_check_branch
          %2230 = sbr.rel (%p2228) target = $region100
        $region99: #{tpu_custom_call.1} parent=95 // pred_region
          %s2231 = sand.u32 %s402, 1
          %s2232 = scalar_lea.sflag [#allocation3], %s2231
          %s2233 = sand.u32 %s402, 1
          %s2234 = smul.addr %s2233, 8
          %s2235 = scalar_lea.vmem [#allocation2], %s2234
          %2236 = dma.done %s2232, 128
        $region100: #{tpu_custom_call.1} parent=95 // pred_fallthru
          _
      $region96: #{tpu_custom_call.1} parent=5 // pred_fallthru
        _
    $region6: #{tpu_custom_call.1} parent=1 // loop_footer
      %s30 = sadd.s32 1, %s26
    $region7: #{tpu_custom_call.1} parent=1 // loop_footer_branch
      %25 = sbr.rel target = $region3
    $region8: #{tpu_custom_call.1} parent=1 // loop_exit
      _
    %2237 = vsyncpa [#allocation3], 1
    %s2238 = scalar_lea.sflag [#allocation3], 1
    %2239 = vsyncpa %s2238, 1

</llo_original>
